<compile_context>
chip_gen: v6e
topology: v6e:2x2x1
jax: 0.10.0
libtpu: 0.0.40
codegen_flags: <defaults>
</compile_context>

<pallas_src>
import jax
import jax.numpy as jnp
from jax.experimental import pallas as pl
from jax.experimental.pallas import tpu as pltpu

INPUT_DIM = 2
LATENT_DIM = 5
BN_EPS = 1e-5
LEAKY_SLOPE = 0.2
LANES = 128
HEAD_W = 16   # fused head width: [mu(5) | pad(3) | logvar(5) | pad(3)]
OUT_W = 16    # output slab width: [recon(2) | mu(5) | logvar(5) | pad(4)]

# ---------------------------------------------------------------------------
# Packed-parameter layout: one (256, 128) f32 slab.  All offsets are static.
#
#   rows   0.. 63, lanes   0..127 : W_enc3 (64,128)
#   rows  64.. 71, lanes   0..127 : W_dec1 (5,128)   (rows 64..68 used)
#   rows  72..199, lanes   0.. 63 : W_dec2 (128,64)
#   rows  72..199, lanes  64.. 79 : W_head (128,16)  [wmu | pad | wlv | pad]
#   rows  72..135, lanes  80..111 : W_dec3 (64,32)
#   rows  72..103, lanes 112..113 : W_dec4 (32,2)
#   rows 200..231, lanes   0.. 63 : W_enc2 (32,64)
#   rows 200..201, lanes  64.. 95 : W_enc1 (2,32)
#   rows 232..251                 : per-feature vectors, one per row (lane 0..)
# ---------------------------------------------------------------------------
_R_W2, _C_W2 = 0, 0       # encoder L3 (64,128)
_R_W4, _C_W4 = 64, 0      # decoder L1 (5,128)
_R_W5, _C_W5 = 72, 0      # decoder L2 (128,64)
_R_W3, _C_W3 = 72, 64     # fused mu|logvar head (128,16)
_R_W6, _C_W6 = 72, 80     # decoder L3 (64,32)
_R_W7, _C_W7 = 72, 112    # decoder L4 (32,2)
_R_W1, _C_W1 = 200, 0     # encoder L2 (32,64)
_R_W0, _C_W0 = 200, 64    # encoder L1 (2,32)

_V_EB1, _V_EG1, _V_EBT1 = 232, 233, 234
_V_EB2, _V_EG2, _V_EBT2 = 235, 236, 237
_V_EB3, _V_EG3, _V_EBT3 = 238, 239, 240
_V_BHEAD = 241
_V_DB1, _V_DG1, _V_DBT1 = 242, 243, 244
_V_DB2, _V_DG2, _V_DBT2 = 245, 246, 247
_V_DB3, _V_DG3, _V_DBT3 = 248, 249, 250
_V_DB4 = 251

_P_ROWS = 256  # total slab rows (128 KiB f32)


# ---------------------------------------------------------------------------
# Kernel
# ---------------------------------------------------------------------------
def _bn_lrelu(h, gamma, beta):
    """BatchNorm1d (training mode, batch stats) + LeakyReLU(0.2).

    One-pass stats: mean = E[h], var = E[h^2] - mean^2 (biased), then applied
    as hn = h*scale + shift."""
    inv_n = jnp.float32(1.0 / h.shape[0])
    mean = jnp.sum(h, axis=0, keepdims=True) * inv_n
    ex2 = jnp.sum(h * h, axis=0, keepdims=True) * inv_n
    var = jnp.maximum(ex2 - mean * mean, 0.0)
    scale = gamma * jax.lax.rsqrt(var + BN_EPS)
    shift = beta - mean * scale
    hn = h * scale + shift
    return jnp.where(hn >= 0, hn, LEAKY_SLOPE * hn)


def vae_kernel(x_ref, eps_ref, p_ref, out_ref):
    x = x_ref[...]        # (B, 2)
    eps = eps_ref[...]    # (B, 5)

    def vec(row, width):  # (1, width) per-feature vector, broadcasts over B
        return p_ref[row:row + 1, 0:width]

    # ---- encoder (all MXU) ----
    h = jnp.dot(x, p_ref[_R_W0:_R_W0 + INPUT_DIM, _C_W0:_C_W0 + 32],
                preferred_element_type=jnp.float32) + vec(_V_EB1, 32)
    h = _bn_lrelu(h, vec(_V_EG1, 32), vec(_V_EBT1, 32))

    h = jnp.dot(h, p_ref[_R_W1:_R_W1 + 32, _C_W1:_C_W1 + 64],
                preferred_element_type=jnp.float32) + vec(_V_EB2, 64)
    h = _bn_lrelu(h, vec(_V_EG2, 64), vec(_V_EBT2, 64))

    h = jnp.dot(h, p_ref[_R_W2:_R_W2 + 64, _C_W2:_C_W2 + 128],
                preferred_element_type=jnp.float32) + vec(_V_EB3, 128)
    h = _bn_lrelu(h, vec(_V_EG3, 128), vec(_V_EBT3, 128))

    # ---- fused mu|logvar head: [mu(5) | pad(3) | logvar(5) | pad(3)] ----
    ml = jnp.dot(h, p_ref[_R_W3:_R_W3 + 128, _C_W3:_C_W3 + HEAD_W],
                 preferred_element_type=jnp.float32) + vec(_V_BHEAD, HEAD_W)
    mu = ml[:, 0:LATENT_DIM]
    logvar = ml[:, 8:8 + LATENT_DIM]        # 8-aligned start

    # ---- reparameterize (eps supplied by caller == torch.randn_like) ----
    z = mu + eps * jnp.exp(0.5 * logvar)

    # ---- decoder (all MXU) ----
    d = jnp.dot(z, p_ref[_R_W4:_R_W4 + LATENT_DIM, _C_W4:_C_W4 + 128],
                preferred_element_type=jnp.float32) + vec(_V_DB1, 128)
    d = _bn_lrelu(d, vec(_V_DG1, 128), vec(_V_DBT1, 128))

    d = jnp.dot(d, p_ref[_R_W5:_R_W5 + 128, _C_W5:_C_W5 + 64],
                preferred_element_type=jnp.float32) + vec(_V_DB2, 64)
    d = _bn_lrelu(d, vec(_V_DG2, 64), vec(_V_DBT2, 64))

    d = jnp.dot(d, p_ref[_R_W6:_R_W6 + 64, _C_W6:_C_W6 + 32],
                preferred_element_type=jnp.float32) + vec(_V_DB3, 32)
    d = _bn_lrelu(d, vec(_V_DG3, 32), vec(_V_DBT3, 32))

    recon = jnp.dot(d, p_ref[_R_W7:_R_W7 + 32, _C_W7:_C_W7 + INPUT_DIM],
                    preferred_element_type=jnp.float32) + vec(_V_DB4, INPUT_DIM)

    # ---- single store of a register-built lane-dense slab ----
    pad = jnp.zeros((recon.shape[0], OUT_W - INPUT_DIM - 2 * LATENT_DIM),
                    recon.dtype)
    out_ref[...] = jnp.concatenate([recon, mu, logvar, pad], axis=1)


# ---------------------------------------------------------------------------
# Parameter init (PyTorch-style), packing, wrapper, and reference.
# ---------------------------------------------------------------------------
def init_params(key, input_dim=INPUT_DIM, latent_dim=LATENT_DIM):
    """Deterministic parameter init (uniform(-1/sqrt(fan_in), +1/sqrt(fan_in)))."""
    dims_enc = [(input_dim, 32), (32, 64), (64, 128)]
    dims_dec = [(latent_dim, 128), (128, 64), (64, 32), (32, input_dim)]

    params = []
    keys = iter(jax.random.split(key, 64))

    def lin(fan_in, fan_out):
        bound = 1.0 / jnp.sqrt(jnp.float32(fan_in))
        w = jax.random.uniform(next(keys), (fan_in, fan_out), jnp.float32,
                               -bound, bound)
        b = jax.random.uniform(next(keys), (1, fan_out), jnp.float32,
                               -bound, bound)
        return w, b

    def bn(f):
        return jnp.ones((1, f), jnp.float32), jnp.zeros((1, f), jnp.float32)

    for fi, fo in dims_enc:
        w, b = lin(fi, fo)
        g, bt = bn(fo)
        params += [w, b, g, bt]
    for _ in range(2):  # mu / logvar heads
        w, b = lin(128, latent_dim)
        params += [w, b]
    for i, (fi, fo) in enumerate(dims_dec):
        w, b = lin(fi, fo)
        params += [w, b]
        if i < 3:
            g, bt = bn(fo)
            params += [g, bt]
    return params


def pack_params(params):
    """Pack the flat param list into the single (256, 128) f32 slab."""
    p = list(params)
    w_enc1, eb1, eg1, ebt1 = p[0:4]
    w_enc2, eb2, eg2, ebt2 = p[4:8]
    w_enc3, eb3, eg3, ebt3 = p[8:12]
    wmu, bmu, wlv, blv = p[12:16]
    w_dec1, db1, dg1, dbt1 = p[16:20]
    w_dec2, db2, dg2, dbt2 = p[20:24]
    w_dec3, db3, dg3, dbt3 = p[24:28]
    w_dec4, db4 = p[28:30]

    buf = jnp.zeros((_P_ROWS, LANES), jnp.float32)

    def put(b, r, c, m):
        m = jnp.asarray(m, jnp.float32)
        if m.ndim == 1:
            m = m.reshape(1, -1)
        return b.at[r:r + m.shape[0], c:c + m.shape[1]].set(m)

    # weights (densely lane-packed)
    buf = put(buf, _R_W0, _C_W0, w_enc1)
    buf = put(buf, _R_W1, _C_W1, w_enc2)
    buf = put(buf, _R_W2, _C_W2, w_enc3)
    head_w = jnp.zeros((128, HEAD_W), jnp.float32)
    head_w = head_w.at[:, 0:LATENT_DIM].set(wmu)
    head_w = head_w.at[:, 8:8 + LATENT_DIM].set(wlv)
    buf = put(buf, _R_W3, _C_W3, head_w)
    buf = put(buf, _R_W4, _C_W4, w_dec1)
    buf = put(buf, _R_W5, _C_W5, w_dec2)
    buf = put(buf, _R_W6, _C_W6, w_dec3)
    buf = put(buf, _R_W7, _C_W7, w_dec4)

    # per-feature vectors (biases / BN gamma / beta), one 128-lane row each
    head_b = jnp.zeros((1, HEAD_W), jnp.float32)
    head_b = head_b.at[:, 0:LATENT_DIM].set(bmu.reshape(1, -1))
    head_b = head_b.at[:, 8:8 + LATENT_DIM].set(blv.reshape(1, -1))
    for r, v in [(_V_EB1, eb1), (_V_EG1, eg1), (_V_EBT1, ebt1),
                 (_V_EB2, eb2), (_V_EG2, eg2), (_V_EBT2, ebt2),
                 (_V_EB3, eb3), (_V_EG3, eg3), (_V_EBT3, ebt3),
                 (_V_BHEAD, head_b),
                 (_V_DB1, db1), (_V_DG1, dg1), (_V_DBT1, dbt1),
                 (_V_DB2, db2), (_V_DG2, dg2), (_V_DBT2, dbt2),
                 (_V_DB3, db3), (_V_DG3, dg3), (_V_DBT3, dbt3),
                 (_V_DB4, db4)]:
        buf = put(buf, r, 0, v)
    return buf


@jax.jit
def vae_forward(x, eps, p_buf):
    B = x.shape[0]
    vmem = pl.BlockSpec(memory_space=pltpu.MemorySpace.VMEM)
    useful_fifo = (INPUT_DIM * 32 + 32 * 64 + 64 * 128 + 128 * 2 * LATENT_DIM
                   + LATENT_DIM * 128 + 128 * 64 + 64 * 32 + 32 * INPUT_DIM)
    flops = 2 * B * useful_fifo
    bytes_accessed = 4 * (_P_ROWS * LANES
                          + B * (INPUT_DIM + LATENT_DIM + OUT_W))
    out = pl.pallas_call(
        vae_kernel,
        out_shape=jax.ShapeDtypeStruct((B, OUT_W), jnp.float32),
        in_specs=[vmem, vmem, vmem],
        out_specs=vmem,
        compiler_params=pltpu.CompilerParams(
            vmem_limit_bytes=32 * 1024 * 1024),
        cost_estimate=pl.CostEstimate(
            flops=flops,
            transcendentals=B * LATENT_DIM + 448,
            bytes_accessed=bytes_accessed),
    )(x, eps, p_buf)
    recon = out[:, 0:INPUT_DIM]
    mu = out[:, INPUT_DIM:INPUT_DIM + LATENT_DIM]
    logvar = out[:, INPUT_DIM + LATENT_DIM:INPUT_DIM + 2 * LATENT_DIM]
    return recon, mu, logvar


def vae_forward_ref(x, eps, params):
    """Pure-JAX reference (uses the unpacked flat param list)."""
    p = list(params)
    h = x
    idx = 0
    for _ in range(3):
        w, b, g, bt = p[idx], p[idx + 1], p[idx + 2], p[idx + 3]
        idx += 4
        h = h @ w + b
        mean = h.mean(0, keepdims=True)
        var = ((h - mean) ** 2).mean(0, keepdims=True)
        h = (h - mean) / jnp.sqrt(var + BN_EPS) * g + bt
        h = jnp.where(h >= 0, h, LEAKY_SLOPE * h)
    wmu, bmu, wlv, blv = p[idx], p[idx + 1], p[idx + 2], p[idx + 3]
    idx += 4
    mu = h @ wmu + bmu
    logvar = h @ wlv + blv
    z = mu + eps * jnp.exp(0.5 * logvar)
    d = z
    for i in range(4):
        w, b = p[idx], p[idx + 1]
        idx += 2
        d = d @ w + b
        if i < 3:
            g, bt = p[idx], p[idx + 1]
            idx += 2
            mean = d.mean(0, keepdims=True)
            var = ((d - mean) ** 2).mean(0, keepdims=True)
            d = (d - mean) / jnp.sqrt(var + BN_EPS) * g + bt
            d = jnp.where(d >= 0, d, LEAKY_SLOPE * d)
    return d, mu, logvar


if __name__ == "__main__":
    key = jax.random.PRNGKey(0)
    k_param, k_x, k_eps = jax.random.split(key, 3)

    B = 8
    x = jax.random.normal(k_x, (B, INPUT_DIM), jnp.float32)
    # eps drawn outside the kernel (equivalent of torch.randn_like(std))
    eps = jax.random.normal(k_eps, (B, LATENT_DIM), jnp.float32)

    params = init_params(k_param)
    p_buf = pack_params(params)

    recon, mu, logvar = vae_forward(x, eps, p_buf)
    jax.block_until_ready((recon, mu, logvar))

    # correctness check vs pure-JAX reference
    r_ref, mu_ref, lv_ref = vae_forward_ref(x, eps, params)
    assert jnp.allclose(recon, r_ref, atol=1e-4, rtol=1e-4)
    assert jnp.allclose(mu, mu_ref, atol=1e-4, rtol=1e-4)
    assert jnp.allclose(logvar, lv_ref, atol=1e-4, rtol=1e-4)

    print("KERNEL_OK")
</pallas_src>

<mosaic_0001>
module attributes {stable_mosaic.version = 11 : i64} {
  func.func @vae_kernel(%arg0: memref<8x2xf32, #tpu.memory_space<vmem>>, %arg1: memref<8x5xf32, #tpu.memory_space<vmem>>, %arg2: memref<256x128xf32, #tpu.memory_space<vmem>>, %arg3: memref<8x16xf32, #tpu.memory_space<vmem>>) attributes {dimension_semantics = [], scalar_prefetch = 0 : i64, scratch_operands = 0 : i64, tpu.core_type = #tpu.core_type<tc>} {
    %c0 = arith.constant 0 : index
    %c0_0 = arith.constant 0 : index
    %0 = vector.load %arg0[%c0, %c0_0] : memref<8x2xf32, #tpu.memory_space<vmem>>, vector<8x2xf32>
    %c0_1 = arith.constant 0 : index
    %c0_2 = arith.constant 0 : index
    %1 = vector.load %arg1[%c0_1, %c0_2] : memref<8x5xf32, #tpu.memory_space<vmem>>, vector<8x5xf32>
    %c200 = arith.constant 200 : index
    %c64 = arith.constant 64 : index
    %2 = vector.load %arg2[%c200, %c64] : memref<256x128xf32, #tpu.memory_space<vmem>>, vector<2x32xf32>
    %cst = arith.constant dense<0.000000e+00> : vector<8x32xf32>
    %3 = tpu.matmul %0, %2, %cst {dimension_numbers = #tpu.dot_dimension_numbers<[1], [0], [0], [1], [0, 0, 1, 1], [], []>} : vector<8x2xf32>, vector<2x32xf32>, vector<8x32xf32> -> vector<8x32xf32>
    %c232 = arith.constant 232 : index
    %c0_3 = arith.constant 0 : index
    %4 = vector.load %arg2[%c232, %c0_3] : memref<256x128xf32, #tpu.memory_space<vmem>>, vector<1x32xf32>
    %5 = vector.broadcast %4 : vector<1x32xf32> to vector<8x32xf32>
    %6 = arith.addf %3, %5 : vector<8x32xf32>
    %c233 = arith.constant 233 : index
    %c0_4 = arith.constant 0 : index
    %7 = vector.load %arg2[%c233, %c0_4] : memref<256x128xf32, #tpu.memory_space<vmem>>, vector<1x32xf32>
    %c234 = arith.constant 234 : index
    %c0_5 = arith.constant 0 : index
    %8 = vector.load %arg2[%c234, %c0_5] : memref<256x128xf32, #tpu.memory_space<vmem>>, vector<1x32xf32>
    %cst_6 = arith.constant dense<0.000000e+00> : vector<32xf32>
    %9 = vector.multi_reduction <add>, %6, %cst_6 [0] : vector<8x32xf32> to vector<32xf32>
    %10 = vector.shape_cast %9 : vector<32xf32> to vector<1x32xf32>
    %cst_7 = arith.constant 1.250000e-01 : f32
    %11 = vector.broadcast %cst_7 : f32 to vector<1x32xf32>
    %12 = arith.mulf %10, %11 : vector<1x32xf32>
    %13 = arith.mulf %6, %6 : vector<8x32xf32>
    %cst_8 = arith.constant dense<0.000000e+00> : vector<32xf32>
    %14 = vector.multi_reduction <add>, %13, %cst_8 [0] : vector<8x32xf32> to vector<32xf32>
    %15 = vector.shape_cast %14 : vector<32xf32> to vector<1x32xf32>
    %cst_9 = arith.constant 1.250000e-01 : f32
    %16 = vector.broadcast %cst_9 : f32 to vector<1x32xf32>
    %17 = arith.mulf %15, %16 : vector<1x32xf32>
    %18 = arith.mulf %12, %12 : vector<1x32xf32>
    %19 = arith.subf %17, %18 : vector<1x32xf32>
    %cst_10 = arith.constant 0.000000e+00 : f32
    %20 = vector.broadcast %cst_10 : f32 to vector<1x32xf32>
    %21 = arith.maximumf %19, %20 : vector<1x32xf32>
    %cst_11 = arith.constant 9.99999974E-6 : f32
    %22 = vector.broadcast %cst_11 : f32 to vector<1x32xf32>
    %23 = arith.addf %21, %22 : vector<1x32xf32>
    %24 = math.rsqrt %23 : vector<1x32xf32>
    %25 = arith.mulf %7, %24 : vector<1x32xf32>
    %26 = arith.mulf %12, %25 : vector<1x32xf32>
    %27 = arith.subf %8, %26 : vector<1x32xf32>
    %28 = vector.broadcast %25 : vector<1x32xf32> to vector<8x32xf32>
    %29 = arith.mulf %6, %28 : vector<8x32xf32>
    %30 = vector.broadcast %27 : vector<1x32xf32> to vector<8x32xf32>
    %31 = arith.addf %29, %30 : vector<8x32xf32>
    %cst_12 = arith.constant 0.000000e+00 : f32
    %32 = vector.broadcast %cst_12 : f32 to vector<8x32xf32>
    %33 = arith.cmpf oge, %31, %32 : vector<8x32xf32>
    %cst_13 = arith.constant 2.000000e-01 : f32
    %34 = vector.broadcast %cst_13 : f32 to vector<8x32xf32>
    %35 = arith.mulf %34, %31 : vector<8x32xf32>
    %36 = arith.select %33, %31, %35 : vector<8x32xi1>, vector<8x32xf32>
    %c200_14 = arith.constant 200 : index
    %c0_15 = arith.constant 0 : index
    %37 = vector.load %arg2[%c200_14, %c0_15] : memref<256x128xf32, #tpu.memory_space<vmem>>, vector<32x64xf32>
    %cst_16 = arith.constant dense<0.000000e+00> : vector<8x64xf32>
    %38 = tpu.matmul %36, %37, %cst_16 {dimension_numbers = #tpu.dot_dimension_numbers<[1], [0], [0], [1], [0, 0, 1, 1], [], []>} : vector<8x32xf32>, vector<32x64xf32>, vector<8x64xf32> -> vector<8x64xf32>
    %c235 = arith.constant 235 : index
    %c0_17 = arith.constant 0 : index
    %39 = vector.load %arg2[%c235, %c0_17] : memref<256x128xf32, #tpu.memory_space<vmem>>, vector<1x64xf32>
    %40 = vector.broadcast %39 : vector<1x64xf32> to vector<8x64xf32>
    %41 = arith.addf %38, %40 : vector<8x64xf32>
    %c236 = arith.constant 236 : index
    %c0_18 = arith.constant 0 : index
    %42 = vector.load %arg2[%c236, %c0_18] : memref<256x128xf32, #tpu.memory_space<vmem>>, vector<1x64xf32>
    %c237 = arith.constant 237 : index
    %c0_19 = arith.constant 0 : index
    %43 = vector.load %arg2[%c237, %c0_19] : memref<256x128xf32, #tpu.memory_space<vmem>>, vector<1x64xf32>
    %cst_20 = arith.constant dense<0.000000e+00> : vector<64xf32>
    %44 = vector.multi_reduction <add>, %41, %cst_20 [0] : vector<8x64xf32> to vector<64xf32>
    %45 = vector.shape_cast %44 : vector<64xf32> to vector<1x64xf32>
    %cst_21 = arith.constant 1.250000e-01 : f32
    %46 = vector.broadcast %cst_21 : f32 to vector<1x64xf32>
    %47 = arith.mulf %45, %46 : vector<1x64xf32>
    %48 = arith.mulf %41, %41 : vector<8x64xf32>
    %cst_22 = arith.constant dense<0.000000e+00> : vector<64xf32>
    %49 = vector.multi_reduction <add>, %48, %cst_22 [0] : vector<8x64xf32> to vector<64xf32>
    %50 = vector.shape_cast %49 : vector<64xf32> to vector<1x64xf32>
    %cst_23 = arith.constant 1.250000e-01 : f32
    %51 = vector.broadcast %cst_23 : f32 to vector<1x64xf32>
    %52 = arith.mulf %50, %51 : vector<1x64xf32>
    %53 = arith.mulf %47, %47 : vector<1x64xf32>
    %54 = arith.subf %52, %53 : vector<1x64xf32>
    %cst_24 = arith.constant 0.000000e+00 : f32
    %55 = vector.broadcast %cst_24 : f32 to vector<1x64xf32>
    %56 = arith.maximumf %54, %55 : vector<1x64xf32>
    %cst_25 = arith.constant 9.99999974E-6 : f32
    %57 = vector.broadcast %cst_25 : f32 to vector<1x64xf32>
    %58 = arith.addf %56, %57 : vector<1x64xf32>
    %59 = math.rsqrt %58 : vector<1x64xf32>
    %60 = arith.mulf %42, %59 : vector<1x64xf32>
    %61 = arith.mulf %47, %60 : vector<1x64xf32>
    %62 = arith.subf %43, %61 : vector<1x64xf32>
    %63 = vector.broadcast %60 : vector<1x64xf32> to vector<8x64xf32>
    %64 = arith.mulf %41, %63 : vector<8x64xf32>
    %65 = vector.broadcast %62 : vector<1x64xf32> to vector<8x64xf32>
    %66 = arith.addf %64, %65 : vector<8x64xf32>
    %cst_26 = arith.constant 0.000000e+00 : f32
    %67 = vector.broadcast %cst_26 : f32 to vector<8x64xf32>
    %68 = arith.cmpf oge, %66, %67 : vector<8x64xf32>
    %cst_27 = arith.constant 2.000000e-01 : f32
    %69 = vector.broadcast %cst_27 : f32 to vector<8x64xf32>
    %70 = arith.mulf %69, %66 : vector<8x64xf32>
    %71 = arith.select %68, %66, %70 : vector<8x64xi1>, vector<8x64xf32>
    %c0_28 = arith.constant 0 : index
    %c0_29 = arith.constant 0 : index
    %72 = vector.load %arg2[%c0_28, %c0_29] : memref<256x128xf32, #tpu.memory_space<vmem>>, vector<64x128xf32>
    %cst_30 = arith.constant dense<0.000000e+00> : vector<8x128xf32>
    %73 = tpu.matmul %71, %72, %cst_30 {dimension_numbers = #tpu.dot_dimension_numbers<[1], [0], [0], [1], [0, 0, 1, 1], [], []>} : vector<8x64xf32>, vector<64x128xf32>, vector<8x128xf32> -> vector<8x128xf32>
    %c238 = arith.constant 238 : index
    %c0_31 = arith.constant 0 : index
    %74 = vector.load %arg2[%c238, %c0_31] : memref<256x128xf32, #tpu.memory_space<vmem>>, vector<1x128xf32>
    %75 = vector.broadcast %74 : vector<1x128xf32> to vector<8x128xf32>
    %76 = arith.addf %73, %75 : vector<8x128xf32>
    %c239 = arith.constant 239 : index
    %c0_32 = arith.constant 0 : index
    %77 = vector.load %arg2[%c239, %c0_32] : memref<256x128xf32, #tpu.memory_space<vmem>>, vector<1x128xf32>
    %c240 = arith.constant 240 : index
    %c0_33 = arith.constant 0 : index
    %78 = vector.load %arg2[%c240, %c0_33] : memref<256x128xf32, #tpu.memory_space<vmem>>, vector<1x128xf32>
    %cst_34 = arith.constant dense<0.000000e+00> : vector<128xf32>
    %79 = vector.multi_reduction <add>, %76, %cst_34 [0] : vector<8x128xf32> to vector<128xf32>
    %80 = vector.shape_cast %79 : vector<128xf32> to vector<1x128xf32>
    %cst_35 = arith.constant 1.250000e-01 : f32
    %81 = vector.broadcast %cst_35 : f32 to vector<1x128xf32>
    %82 = arith.mulf %80, %81 : vector<1x128xf32>
    %83 = arith.mulf %76, %76 : vector<8x128xf32>
    %cst_36 = arith.constant dense<0.000000e+00> : vector<128xf32>
    %84 = vector.multi_reduction <add>, %83, %cst_36 [0] : vector<8x128xf32> to vector<128xf32>
    %85 = vector.shape_cast %84 : vector<128xf32> to vector<1x128xf32>
    %cst_37 = arith.constant 1.250000e-01 : f32
    %86 = vector.broadcast %cst_37 : f32 to vector<1x128xf32>
    %87 = arith.mulf %85, %86 : vector<1x128xf32>
    %88 = arith.mulf %82, %82 : vector<1x128xf32>
    %89 = arith.subf %87, %88 : vector<1x128xf32>
    %cst_38 = arith.constant 0.000000e+00 : f32
    %90 = vector.broadcast %cst_38 : f32 to vector<1x128xf32>
    %91 = arith.maximumf %89, %90 : vector<1x128xf32>
    %cst_39 = arith.constant 9.99999974E-6 : f32
    %92 = vector.broadcast %cst_39 : f32 to vector<1x128xf32>
    %93 = arith.addf %91, %92 : vector<1x128xf32>
    %94 = math.rsqrt %93 : vector<1x128xf32>
    %95 = arith.mulf %77, %94 : vector<1x128xf32>
    %96 = arith.mulf %82, %95 : vector<1x128xf32>
    %97 = arith.subf %78, %96 : vector<1x128xf32>
    %98 = vector.broadcast %95 : vector<1x128xf32> to vector<8x128xf32>
    %99 = arith.mulf %76, %98 : vector<8x128xf32>
    %100 = vector.broadcast %97 : vector<1x128xf32> to vector<8x128xf32>
    %101 = arith.addf %99, %100 : vector<8x128xf32>
    %cst_40 = arith.constant 0.000000e+00 : f32
    %102 = vector.broadcast %cst_40 : f32 to vector<8x128xf32>
    %103 = arith.cmpf oge, %101, %102 : vector<8x128xf32>
    %cst_41 = arith.constant 2.000000e-01 : f32
    %104 = vector.broadcast %cst_41 : f32 to vector<8x128xf32>
    %105 = arith.mulf %104, %101 : vector<8x128xf32>
    %106 = arith.select %103, %101, %105 : vector<8x128xi1>, vector<8x128xf32>
    %c72 = arith.constant 72 : index
    %c64_42 = arith.constant 64 : index
    %107 = vector.load %arg2[%c72, %c64_42] : memref<256x128xf32, #tpu.memory_space<vmem>>, vector<128x16xf32>
    %cst_43 = arith.constant dense<0.000000e+00> : vector<8x16xf32>
    %108 = tpu.matmul %106, %107, %cst_43 {dimension_numbers = #tpu.dot_dimension_numbers<[1], [0], [0], [1], [0, 0, 1, 1], [], []>} : vector<8x128xf32>, vector<128x16xf32>, vector<8x16xf32> -> vector<8x16xf32>
    %c241 = arith.constant 241 : index
    %c0_44 = arith.constant 0 : index
    %109 = vector.load %arg2[%c241, %c0_44] : memref<256x128xf32, #tpu.memory_space<vmem>>, vector<1x16xf32>
    %110 = vector.broadcast %109 : vector<1x16xf32> to vector<8x16xf32>
    %111 = arith.addf %108, %110 : vector<8x16xf32>
    %112 = vector.extract_strided_slice %111 {offsets = [0, 0], sizes = [8, 5], strides = [1, 1]} : vector<8x16xf32> to vector<8x5xf32>
    %113 = vector.extract_strided_slice %111 {offsets = [0, 8], sizes = [8, 5], strides = [1, 1]} : vector<8x16xf32> to vector<8x5xf32>
    %cst_45 = arith.constant 5.000000e-01 : f32
    %114 = vector.broadcast %cst_45 : f32 to vector<8x5xf32>
    %115 = arith.mulf %114, %113 : vector<8x5xf32>
    %116 = math.exp %115 : vector<8x5xf32>
    %117 = arith.mulf %1, %116 : vector<8x5xf32>
    %118 = arith.addf %112, %117 : vector<8x5xf32>
    %c64_46 = arith.constant 64 : index
    %c0_47 = arith.constant 0 : index
    %119 = vector.load %arg2[%c64_46, %c0_47] : memref<256x128xf32, #tpu.memory_space<vmem>>, vector<5x128xf32>
    %cst_48 = arith.constant dense<0.000000e+00> : vector<8x128xf32>
    %120 = tpu.matmul %118, %119, %cst_48 {dimension_numbers = #tpu.dot_dimension_numbers<[1], [0], [0], [1], [0, 0, 1, 1], [], []>} : vector<8x5xf32>, vector<5x128xf32>, vector<8x128xf32> -> vector<8x128xf32>
    %c242 = arith.constant 242 : index
    %c0_49 = arith.constant 0 : index
    %121 = vector.load %arg2[%c242, %c0_49] : memref<256x128xf32, #tpu.memory_space<vmem>>, vector<1x128xf32>
    %122 = vector.broadcast %121 : vector<1x128xf32> to vector<8x128xf32>
    %123 = arith.addf %120, %122 : vector<8x128xf32>
    %c243 = arith.constant 243 : index
    %c0_50 = arith.constant 0 : index
    %124 = vector.load %arg2[%c243, %c0_50] : memref<256x128xf32, #tpu.memory_space<vmem>>, vector<1x128xf32>
    %c244 = arith.constant 244 : index
    %c0_51 = arith.constant 0 : index
    %125 = vector.load %arg2[%c244, %c0_51] : memref<256x128xf32, #tpu.memory_space<vmem>>, vector<1x128xf32>
    %cst_52 = arith.constant dense<0.000000e+00> : vector<128xf32>
    %126 = vector.multi_reduction <add>, %123, %cst_52 [0] : vector<8x128xf32> to vector<128xf32>
    %127 = vector.shape_cast %126 : vector<128xf32> to vector<1x128xf32>
    %cst_53 = arith.constant 1.250000e-01 : f32
    %128 = vector.broadcast %cst_53 : f32 to vector<1x128xf32>
    %129 = arith.mulf %127, %128 : vector<1x128xf32>
    %130 = arith.mulf %123, %123 : vector<8x128xf32>
    %cst_54 = arith.constant dense<0.000000e+00> : vector<128xf32>
    %131 = vector.multi_reduction <add>, %130, %cst_54 [0] : vector<8x128xf32> to vector<128xf32>
    %132 = vector.shape_cast %131 : vector<128xf32> to vector<1x128xf32>
    %cst_55 = arith.constant 1.250000e-01 : f32
    %133 = vector.broadcast %cst_55 : f32 to vector<1x128xf32>
    %134 = arith.mulf %132, %133 : vector<1x128xf32>
    %135 = arith.mulf %129, %129 : vector<1x128xf32>
    %136 = arith.subf %134, %135 : vector<1x128xf32>
    %cst_56 = arith.constant 0.000000e+00 : f32
    %137 = vector.broadcast %cst_56 : f32 to vector<1x128xf32>
    %138 = arith.maximumf %136, %137 : vector<1x128xf32>
    %cst_57 = arith.constant 9.99999974E-6 : f32
    %139 = vector.broadcast %cst_57 : f32 to vector<1x128xf32>
    %140 = arith.addf %138, %139 : vector<1x128xf32>
    %141 = math.rsqrt %140 : vector<1x128xf32>
    %142 = arith.mulf %124, %141 : vector<1x128xf32>
    %143 = arith.mulf %129, %142 : vector<1x128xf32>
    %144 = arith.subf %125, %143 : vector<1x128xf32>
    %145 = vector.broadcast %142 : vector<1x128xf32> to vector<8x128xf32>
    %146 = arith.mulf %123, %145 : vector<8x128xf32>
    %147 = vector.broadcast %144 : vector<1x128xf32> to vector<8x128xf32>
    %148 = arith.addf %146, %147 : vector<8x128xf32>
    %cst_58 = arith.constant 0.000000e+00 : f32
    %149 = vector.broadcast %cst_58 : f32 to vector<8x128xf32>
    %150 = arith.cmpf oge, %148, %149 : vector<8x128xf32>
    %cst_59 = arith.constant 2.000000e-01 : f32
    %151 = vector.broadcast %cst_59 : f32 to vector<8x128xf32>
    %152 = arith.mulf %151, %148 : vector<8x128xf32>
    %153 = arith.select %150, %148, %152 : vector<8x128xi1>, vector<8x128xf32>
    %c72_60 = arith.constant 72 : index
    %c0_61 = arith.constant 0 : index
    %154 = vector.load %arg2[%c72_60, %c0_61] : memref<256x128xf32, #tpu.memory_space<vmem>>, vector<128x64xf32>
    %cst_62 = arith.constant dense<0.000000e+00> : vector<8x64xf32>
    %155 = tpu.matmul %153, %154, %cst_62 {dimension_numbers = #tpu.dot_dimension_numbers<[1], [0], [0], [1], [0, 0, 1, 1], [], []>} : vector<8x128xf32>, vector<128x64xf32>, vector<8x64xf32> -> vector<8x64xf32>
    %c245 = arith.constant 245 : index
    %c0_63 = arith.constant 0 : index
    %156 = vector.load %arg2[%c245, %c0_63] : memref<256x128xf32, #tpu.memory_space<vmem>>, vector<1x64xf32>
    %157 = vector.broadcast %156 : vector<1x64xf32> to vector<8x64xf32>
    %158 = arith.addf %155, %157 : vector<8x64xf32>
    %c246 = arith.constant 246 : index
    %c0_64 = arith.constant 0 : index
    %159 = vector.load %arg2[%c246, %c0_64] : memref<256x128xf32, #tpu.memory_space<vmem>>, vector<1x64xf32>
    %c247 = arith.constant 247 : index
    %c0_65 = arith.constant 0 : index
    %160 = vector.load %arg2[%c247, %c0_65] : memref<256x128xf32, #tpu.memory_space<vmem>>, vector<1x64xf32>
    %cst_66 = arith.constant dense<0.000000e+00> : vector<64xf32>
    %161 = vector.multi_reduction <add>, %158, %cst_66 [0] : vector<8x64xf32> to vector<64xf32>
    %162 = vector.shape_cast %161 : vector<64xf32> to vector<1x64xf32>
    %cst_67 = arith.constant 1.250000e-01 : f32
    %163 = vector.broadcast %cst_67 : f32 to vector<1x64xf32>
    %164 = arith.mulf %162, %163 : vector<1x64xf32>
    %165 = arith.mulf %158, %158 : vector<8x64xf32>
    %cst_68 = arith.constant dense<0.000000e+00> : vector<64xf32>
    %166 = vector.multi_reduction <add>, %165, %cst_68 [0] : vector<8x64xf32> to vector<64xf32>
    %167 = vector.shape_cast %166 : vector<64xf32> to vector<1x64xf32>
    %cst_69 = arith.constant 1.250000e-01 : f32
    %168 = vector.broadcast %cst_69 : f32 to vector<1x64xf32>
    %169 = arith.mulf %167, %168 : vector<1x64xf32>
    %170 = arith.mulf %164, %164 : vector<1x64xf32>
    %171 = arith.subf %169, %170 : vector<1x64xf32>
    %cst_70 = arith.constant 0.000000e+00 : f32
    %172 = vector.broadcast %cst_70 : f32 to vector<1x64xf32>
    %173 = arith.maximumf %171, %172 : vector<1x64xf32>
    %cst_71 = arith.constant 9.99999974E-6 : f32
    %174 = vector.broadcast %cst_71 : f32 to vector<1x64xf32>
    %175 = arith.addf %173, %174 : vector<1x64xf32>
    %176 = math.rsqrt %175 : vector<1x64xf32>
    %177 = arith.mulf %159, %176 : vector<1x64xf32>
    %178 = arith.mulf %164, %177 : vector<1x64xf32>
    %179 = arith.subf %160, %178 : vector<1x64xf32>
    %180 = vector.broadcast %177 : vector<1x64xf32> to vector<8x64xf32>
    %181 = arith.mulf %158, %180 : vector<8x64xf32>
    %182 = vector.broadcast %179 : vector<1x64xf32> to vector<8x64xf32>
    %183 = arith.addf %181, %182 : vector<8x64xf32>
    %cst_72 = arith.constant 0.000000e+00 : f32
    %184 = vector.broadcast %cst_72 : f32 to vector<8x64xf32>
    %185 = arith.cmpf oge, %183, %184 : vector<8x64xf32>
    %cst_73 = arith.constant 2.000000e-01 : f32
    %186 = vector.broadcast %cst_73 : f32 to vector<8x64xf32>
    %187 = arith.mulf %186, %183 : vector<8x64xf32>
    %188 = arith.select %185, %183, %187 : vector<8x64xi1>, vector<8x64xf32>
    %c72_74 = arith.constant 72 : index
    %c80 = arith.constant 80 : index
    %189 = vector.load %arg2[%c72_74, %c80] : memref<256x128xf32, #tpu.memory_space<vmem>>, vector<64x32xf32>
    %cst_75 = arith.constant dense<0.000000e+00> : vector<8x32xf32>
    %190 = tpu.matmul %188, %189, %cst_75 {dimension_numbers = #tpu.dot_dimension_numbers<[1], [0], [0], [1], [0, 0, 1, 1], [], []>} : vector<8x64xf32>, vector<64x32xf32>, vector<8x32xf32> -> vector<8x32xf32>
    %c248 = arith.constant 248 : index
    %c0_76 = arith.constant 0 : index
    %191 = vector.load %arg2[%c248, %c0_76] : memref<256x128xf32, #tpu.memory_space<vmem>>, vector<1x32xf32>
    %192 = vector.broadcast %191 : vector<1x32xf32> to vector<8x32xf32>
    %193 = arith.addf %190, %192 : vector<8x32xf32>
    %c249 = arith.constant 249 : index
    %c0_77 = arith.constant 0 : index
    %194 = vector.load %arg2[%c249, %c0_77] : memref<256x128xf32, #tpu.memory_space<vmem>>, vector<1x32xf32>
    %c250 = arith.constant 250 : index
    %c0_78 = arith.constant 0 : index
    %195 = vector.load %arg2[%c250, %c0_78] : memref<256x128xf32, #tpu.memory_space<vmem>>, vector<1x32xf32>
    %cst_79 = arith.constant dense<0.000000e+00> : vector<32xf32>
    %196 = vector.multi_reduction <add>, %193, %cst_79 [0] : vector<8x32xf32> to vector<32xf32>
    %197 = vector.shape_cast %196 : vector<32xf32> to vector<1x32xf32>
    %cst_80 = arith.constant 1.250000e-01 : f32
    %198 = vector.broadcast %cst_80 : f32 to vector<1x32xf32>
    %199 = arith.mulf %197, %198 : vector<1x32xf32>
    %200 = arith.mulf %193, %193 : vector<8x32xf32>
    %cst_81 = arith.constant dense<0.000000e+00> : vector<32xf32>
    %201 = vector.multi_reduction <add>, %200, %cst_81 [0] : vector<8x32xf32> to vector<32xf32>
    %202 = vector.shape_cast %201 : vector<32xf32> to vector<1x32xf32>
    %cst_82 = arith.constant 1.250000e-01 : f32
    %203 = vector.broadcast %cst_82 : f32 to vector<1x32xf32>
    %204 = arith.mulf %202, %203 : vector<1x32xf32>
    %205 = arith.mulf %199, %199 : vector<1x32xf32>
    %206 = arith.subf %204, %205 : vector<1x32xf32>
    %cst_83 = arith.constant 0.000000e+00 : f32
    %207 = vector.broadcast %cst_83 : f32 to vector<1x32xf32>
    %208 = arith.maximumf %206, %207 : vector<1x32xf32>
    %cst_84 = arith.constant 9.99999974E-6 : f32
    %209 = vector.broadcast %cst_84 : f32 to vector<1x32xf32>
    %210 = arith.addf %208, %209 : vector<1x32xf32>
    %211 = math.rsqrt %210 : vector<1x32xf32>
    %212 = arith.mulf %194, %211 : vector<1x32xf32>
    %213 = arith.mulf %199, %212 : vector<1x32xf32>
    %214 = arith.subf %195, %213 : vector<1x32xf32>
    %215 = vector.broadcast %212 : vector<1x32xf32> to vector<8x32xf32>
    %216 = arith.mulf %193, %215 : vector<8x32xf32>
    %217 = vector.broadcast %214 : vector<1x32xf32> to vector<8x32xf32>
    %218 = arith.addf %216, %217 : vector<8x32xf32>
    %cst_85 = arith.constant 0.000000e+00 : f32
    %219 = vector.broadcast %cst_85 : f32 to vector<8x32xf32>
    %220 = arith.cmpf oge, %218, %219 : vector<8x32xf32>
    %cst_86 = arith.constant 2.000000e-01 : f32
    %221 = vector.broadcast %cst_86 : f32 to vector<8x32xf32>
    %222 = arith.mulf %221, %218 : vector<8x32xf32>
    %223 = arith.select %220, %218, %222 : vector<8x32xi1>, vector<8x32xf32>
    %c72_87 = arith.constant 72 : index
    %c112 = arith.constant 112 : index
    %224 = vector.load %arg2[%c72_87, %c112] : memref<256x128xf32, #tpu.memory_space<vmem>>, vector<32x2xf32>
    %cst_88 = arith.constant dense<0.000000e+00> : vector<8x2xf32>
    %225 = tpu.matmul %223, %224, %cst_88 {dimension_numbers = #tpu.dot_dimension_numbers<[1], [0], [0], [1], [0, 0, 1, 1], [], []>} : vector<8x32xf32>, vector<32x2xf32>, vector<8x2xf32> -> vector<8x2xf32>
    %c251 = arith.constant 251 : index
    %c0_89 = arith.constant 0 : index
    %226 = vector.load %arg2[%c251, %c0_89] : memref<256x128xf32, #tpu.memory_space<vmem>>, vector<1x2xf32>
    %227 = vector.broadcast %226 : vector<1x2xf32> to vector<8x2xf32>
    %228 = arith.addf %225, %227 : vector<8x2xf32>
    %cst_90 = arith.constant 0.000000e+00 : f32
    %229 = vector.broadcast %cst_90 : f32 to vector<8x4xf32>
    %230 = tpu.concatenate %228, %112, %113, %229 in 1 : vector<8x2xf32>, vector<8x5xf32>, vector<8x5xf32>, vector<8x4xf32> -> vector<8x16xf32>
    %c0_91 = arith.constant 0 : index
    %c0_92 = arith.constant 0 : index
    %231 = vector.load %arg3[%c0_91, %c0_92] : memref<8x16xf32, #tpu.memory_space<vmem>>, vector<8x16xf32>
    tpu.vector_store %arg3[%c0_91, %c0_92], %230 {strides = array<i32>} : memref<8x16xf32, #tpu.memory_space<vmem>>, vector<8x16xf32>,
    return
  }
}

</mosaic_0001>

<llo_original>
// kernel: vae_forward.1
$region0: #{vae_forward.1}
  #allocation0 [shape = 'u32[]', space=smem, size = 0x4, offset = 0x4, fixed_abs, tag = 'smem constant byte address 0x4 - core index']
  #allocation1 [shape = 'u32[144,128]{1,0:T(1,128)}', space=vmem, size = 0x12000, scoped, tag = 'internal scratch']
  %s0 = inlined_call_operand.vmem [shape: f32[8,2], index: 0, kind: input, shape index: {}]
  %s1 = inlined_call_operand.vmem [shape: f32[8,5], index: 1, kind: input, shape index: {}]
  %s2 = inlined_call_operand.hbm [shape: f32[256,128], index: 2, kind: input, shape index: {}]
  %s3 = inlined_call_operand.vmem [shape: f32[8,16], index: 3, kind: output, shape index: {}]
  %s4 = sld [smem:[#allocation0]]
  $region26: #{vae_forward.1} parent=0
    _
  %s6 = ssub.s32 1, %s4
  %s7 = scalar_select 0, %s6, %s4
  $region1: #{vae_forward.1} parent=0
    #allocation2 [shape = 'u8[131072]{0}', space=vmem, size = 0x20000, scoped, tag = 'input window, operand 2, single buffered']
    #allocation3 [shape = 's32[1]{0}', space=sflag, size = 0x4, scoped, tag = 'scoped memory for vae_forward.1']
    %8 = vsyncpa [#allocation3], 0
    // Predicated region
    $region2: #{vae_forward.1} parent=1 // pred_check
      _
    $region3: #{vae_forward.1} parent=1 // pred_check_branch
      %10 = sbr.rel (0) target = $region5
    $region4: #{vae_forward.1} parent=1 // pred_region
      _
    $region5: #{vae_forward.1} parent=1 // pred_fallthru
      _
    // Predicated region
    $region6: #{vae_forward.1} parent=1 // pred_check
      _
    $region7: #{vae_forward.1} parent=1 // pred_check_branch
      %12 = sbr.rel (0) target = $region9
    $region8: #{vae_forward.1} parent=1 // pred_region
      _
    $region9: #{vae_forward.1} parent=1 // pred_fallthru
      _
    // Predicated region
    $region10: #{vae_forward.1} parent=1 // pred_check
      _
    $region11: #{vae_forward.1} parent=1 // pred_check_branch
      %14 = sbr.rel (0) target = $region13
    $region12: #{vae_forward.1} parent=1 // pred_region
      %s16 = ssub.s32 4096, 4096
      %17 = vsyncadd [#allocation3], %s16
      %s18 = sshll.u32 [#allocation2], 4
      %s19 = int_to_ptr.vmem [resolvable:$true] %s18
      %24 = dma.hbm_to_vmem [thread:$0]  %s2, 4096, %s19, [#allocation3], 128, 128, 8
    $region13: #{vae_forward.1} parent=1 // pred_fallthru
      _
    // Predicated region
    $region14: #{vae_forward.1} parent=1 // pred_check
      _
    $region15: #{vae_forward.1} parent=1 // pred_check_branch
      %26 = sbr.rel (0) target = $region17
    $region16: #{vae_forward.1} parent=1 // pred_region
      %27 = dma.done [#allocation3], 4096
    $region17: #{vae_forward.1} parent=1 // pred_fallthru
      _
    %v28 = vld [vmem:[%s0] sm:$0xff]
    %v29 = vld [vmem:[%s1] sm:$0xff]
    %v30 = vld [vmem:[#allocation2 + $0xc8] sm:$0x3]
    %v31 = vld [vmem:[#allocation2 + $0xe8] sm:$0x1]
    %v32 = vlaneseq
    %v33 = vshrl.u32 %v32, 7
    %v34 = vsub.s32 0, %v33
    %v35 = vrot.slane %v31, %v34
    %37 = vrot.lane.b32.xlu0 %v30, 64
    %v38 = vpop.permute.xlu0 %37
    %vm39 = vcmask 15360
    %v41 = vsel %vm39, %v28, 0
    %vm43 = vcmask 1041408
    %v44 = vsel %vm43, %v38, 0
    %46 = vmatprep.subr.mxu0 0.0
    %47 = vmatpush1.msra.mxu0 0.0
    %48 = vmatprep.subr.mxu0 0.0
    %49 = vmatpush1.msra.mxu0 0.0
    %50 = vmatprep.subr.mxu0 0.0
    %51 = vmatpush1.msra.mxu0 0.0
    %52 = vmatprep.subr.mxu0 0.0
    %53 = vmatpush1.msra.mxu0 0.0
    %54 = vmatprep.subr.mxu0 0.0
    %55 = vmatpush1.msra.mxu0 0.0
    %56 = vmatprep.subr.mxu0 0.0
    %57 = vmatpush1.msra.mxu0 0.0
    %58 = vmatprep.subr.mxu0 0.0
    %59 = vmatpush1.msra.mxu0 0.0
    %60 = vmatprep.subr.mxu0 0.0
    %61 = vmatpush1.msra.mxu0 0.0
    %62 = vmatprep.subr.mxu0 0.0
    %63 = vmatpush1.msra.mxu0 0.0
    %64 = vmatprep.subr.mxu0 0.0
    %65 = vmatpush1.msra.mxu0 0.0
    %66 = vmatprep.subr.mxu0 0.0
    %67 = vmatpush1.msra.mxu0 0.0
    %68 = vmatprep.subr.mxu0 0.0
    %69 = vmatpush1.msra.mxu0 0.0
    %70 = vmatprep.subr.mxu0 0.0
    %71 = vmatpush1.msra.mxu0 0.0
    %72 = vmatprep.subr.mxu0 0.0
    %73 = vmatpush1.msra.mxu0 0.0
    %74 = vmatprep.subr.mxu0 0.0
    %75 = vmatpush1.msra.mxu0 0.0
    %76 = vmatprep.subr.mxu0 0.0
    %77 = vmatpush1.msra.mxu0 %v44
    %78 = vmatprep.subr.mxu0 0.0
    %79 = vmatpush2.msra.mxu0 0.0
    %80 = vmatprep.subr.mxu0 0.0
    %81 = vmatpush2.msra.mxu0 0.0
    %82 = vmatprep.subr.mxu0 0.0
    %83 = vmatpush2.msra.mxu0 0.0
    %84 = vmatprep.subr.mxu0 0.0
    %85 = vmatpush2.msra.mxu0 0.0
    %86 = vmatprep.subr.mxu0 0.0
    %87 = vmatpush2.msra.mxu0 0.0
    %88 = vmatprep.subr.mxu0 0.0
    %89 = vmatpush2.msra.mxu0 0.0
    %90 = vmatprep.subr.mxu0 0.0
    %91 = vmatpush2.msra.mxu0 0.0
    %92 = vmatprep.subr.mxu0 0.0
    %93 = vmatpush2.msra.mxu0 0.0
    %94 = vmatprep.subr.mxu0 0.0
    %95 = vmatpush2.msra.mxu0 0.0
    %96 = vmatprep.subr.mxu0 0.0
    %97 = vmatpush2.msra.mxu0 0.0
    %98 = vmatprep.subr.mxu0 0.0
    %99 = vmatpush2.msra.mxu0 0.0
    %100 = vmatprep.subr.mxu0 0.0
    %101 = vmatpush2.msra.mxu0 0.0
    %102 = vmatprep.subr.mxu0 0.0
    %103 = vmatpush2.msra.mxu0 0.0
    %104 = vmatprep.subr.mxu0 0.0
    %105 = vmatpush2.msra.mxu0 0.0
    %106 = vmatprep.subr.mxu0 0.0
    %107 = vmatpush2.msra.mxu0 0.0
    %108 = vmatprep.subr.mxu0 0.0
    %109 = vmatpush2.msra.mxu0 0.0
    %110 = vmatprep.mubr.f32.mxu0 0.0
    %111 = vmatmul.mubr.f32.gmra.mxu0 %v41
    %v112 = vpop.f32.mrf.mxu0
    %v113 = vadd.f32 %v35, %v112
    %v114 = vpop.f32.mrf.mxu0
    %115 = vdwg.mxu0
    %v116 = vld [vmem:[#allocation2 + $0xe9] sm:$0x1]
    %v117 = vld [vmem:[#allocation2 + $0xea] sm:$0x1]
    %vm118 = vcmask 261120
    %v119 = vsel %vm118, %v113, 0.0
    %v120 = vrot.slane %v119, 4
    %v121 = vadd.f32 %v119, %v120
    %v122 = vrot.slane %v121, 2
    %v123 = vadd.f32 %v121, %v122
    %v124 = vrot.slane %v123, 1
    %v125 = vadd.f32 %v123, %v124
    %v126 = vmul.f32 %v125, 0.125
    %v127 = vmul.f32 %v113, %v113
    %v128 = vsel %vm118, %v127, 0.0
    %v129 = vrot.slane %v128, 4
    %v130 = vadd.f32 %v128, %v129
    %v131 = vrot.slane %v130, 2
    %v132 = vadd.f32 %v130, %v131
    %v133 = vrot.slane %v132, 1
    %v134 = vadd.f32 %v132, %v133
    %v135 = vmul.f32 %v134, 0.125
    %v136 = vmul.f32 %v126, %v126
    %v137 = vsub.f32 %v135, %v136
    %v138 = vmax.f32 %v137, 0.0
    %v139 = vadd.f32 %v138, 1e-05
    %v140 = vrsqrt.pop %v139
    %v141 = vmul.f32 %v116, %v140
    %v142 = vmul.f32 %v126, %v141
    %v143 = vsub.f32 %v117, %v142
    %v144 = vlaneseq
    %v145 = vshrl.u32 %v144, 7
    %v146 = vsub.s32 0, %v145
    %v147 = vrot.slane %v141, %v146
    %v148 = vmul.f32 %v113, %v147
    %v149 = vlaneseq
    %v150 = vshrl.u32 %v149, 7
    %v151 = vsub.s32 0, %v150
    %v152 = vrot.slane %v143, %v151
    %v153 = vadd.f32 %v148, %v152
    %vm154 = vcmp.ge.f32.partialorder %v153, 0.0
    %v155 = vmul.f32 %v153, 0.2
    %v156 = vsel %vm154, %v153, %v155
    %v157 = vld [vmem:[#allocation2 + $0xc8] sm:$0xff]
    %v158 = vld [vmem:[#allocation2 + $0xd0] sm:$0xff]
    %v159 = vld [vmem:[#allocation2 + $0xd8] sm:$0xff]
    %v160 = vld [vmem:[#allocation2 + $0xe0] sm:$0xff]
    %v161 = vld [vmem:[#allocation2 + $0xeb] sm:$0x1]
    %v162 = vlaneseq
    %v163 = vshrl.u32 %v162, 7
    %v164 = vsub.s32 0, %v163
    %v165 = vrot.slane %v161, %v164
    %v167 = vsel %vm118, %v156, 0
    %169 = vmatprep.subr.mxu0 0.0
    %170 = vmatpush1.msra.mxu0 0.0
    %171 = vmatprep.subr.mxu0 0.0
    %172 = vmatpush1.msra.mxu0 0.0
    %173 = vmatprep.subr.mxu0 0.0
    %174 = vmatpush1.msra.mxu0 0.0
    %175 = vmatprep.subr.mxu0 0.0
    %176 = vmatpush1.msra.mxu0 0.0
    %177 = vmatprep.subr.mxu0 0.0
    %178 = vmatpush1.msra.mxu0 0.0
    %179 = vmatprep.subr.mxu0 0.0
    %180 = vmatpush1.msra.mxu0 0.0
    %181 = vmatprep.subr.mxu0 0.0
    %182 = vmatpush1.msra.mxu0 0.0
    %183 = vmatprep.subr.mxu0 0.0
    %184 = vmatpush1.msra.mxu0 0.0
    %185 = vmatprep.subr.mxu0 0.0
    %186 = vmatpush1.msra.mxu0 0.0
    %187 = vmatprep.subr.mxu0 0.0
    %188 = vmatpush1.msra.mxu0 0.0
    %189 = vmatprep.subr.mxu0 0.0
    %190 = vmatpush1.msra.mxu0 0.0
    %191 = vmatprep.subr.mxu0 0.0
    %192 = vmatpush1.msra.mxu0 0.0
    %193 = vmatprep.subr.mxu0 0.0
    %194 = vmatpush1.msra.mxu0 %v160
    %195 = vmatprep.subr.mxu0 0.0
    %196 = vmatpush1.msra.mxu0 %v159
    %197 = vmatprep.subr.mxu0 0.0
    %198 = vmatpush1.msra.mxu0 %v158
    %199 = vmatprep.subr.mxu0 0.0
    %200 = vmatpush1.msra.mxu0 %v157
    %201 = vmatprep.subr.mxu0 0.0
    %202 = vmatpush2.msra.mxu0 0.0
    %203 = vmatprep.subr.mxu0 0.0
    %204 = vmatpush2.msra.mxu0 0.0
    %205 = vmatprep.subr.mxu0 0.0
    %206 = vmatpush2.msra.mxu0 0.0
    %207 = vmatprep.subr.mxu0 0.0
    %208 = vmatpush2.msra.mxu0 0.0
    %209 = vmatprep.subr.mxu0 0.0
    %210 = vmatpush2.msra.mxu0 0.0
    %211 = vmatprep.subr.mxu0 0.0
    %212 = vmatpush2.msra.mxu0 0.0
    %213 = vmatprep.subr.mxu0 0.0
    %214 = vmatpush2.msra.mxu0 0.0
    %215 = vmatprep.subr.mxu0 0.0
    %216 = vmatpush2.msra.mxu0 0.0
    %217 = vmatprep.subr.mxu0 0.0
    %218 = vmatpush2.msra.mxu0 0.0
    %219 = vmatprep.subr.mxu0 0.0
    %220 = vmatpush2.msra.mxu0 0.0
    %221 = vmatprep.subr.mxu0 0.0
    %222 = vmatpush2.msra.mxu0 0.0
    %223 = vmatprep.subr.mxu0 0.0
    %224 = vmatpush2.msra.mxu0 0.0
    %225 = vmatprep.subr.mxu0 0.0
    %226 = vmatpush2.msra.mxu0 0.0
    %227 = vmatprep.subr.mxu0 0.0
    %228 = vmatpush2.msra.mxu0 0.0
    %229 = vmatprep.subr.mxu0 0.0
    %230 = vmatpush2.msra.mxu0 0.0
    %231 = vmatprep.subr.mxu0 0.0
    %232 = vmatpush2.msra.mxu0 0.0
    %233 = vmatprep.mubr.f32.mxu0 0.0
    %234 = vmatmul.mubr.f32.gmra.mxu0 %v167
    %v235 = vpop.f32.mrf.mxu0
    %v236 = vadd.f32 %v165, %v235
    %v237 = vpop.f32.mrf.mxu0
    %238 = vdwg.mxu0
    %v239 = vld [vmem:[#allocation2 + $0xec] sm:$0x1]
    %v240 = vld [vmem:[#allocation2 + $0xed] sm:$0x1]
    %vm241 = vcmask 523264
    %v242 = vsel %vm241, %v236, 0.0
    %v243 = vrot.slane %v242, 4
    %v244 = vadd.f32 %v242, %v243
    %v245 = vrot.slane %v244, 2
    %v246 = vadd.f32 %v244, %v245
    %v247 = vrot.slane %v246, 1
    %v248 = vadd.f32 %v246, %v247
    %v249 = vmul.f32 %v248, 0.125
    %v250 = vmul.f32 %v236, %v236
    %v251 = vsel %vm241, %v250, 0.0
    %v252 = vrot.slane %v251, 4
    %v253 = vadd.f32 %v251, %v252
    %v254 = vrot.slane %v253, 2
    %v255 = vadd.f32 %v253, %v254
    %v256 = vrot.slane %v255, 1
    %v257 = vadd.f32 %v255, %v256
    %v258 = vmul.f32 %v257, 0.125
    %v259 = vmul.f32 %v249, %v249
    %v260 = vsub.f32 %v258, %v259
    %v261 = vmax.f32 %v260, 0.0
    %v262 = vadd.f32 %v261, 1e-05
    %v263 = vrsqrt.pop %v262
    %v264 = vmul.f32 %v239, %v263
    %v265 = vmul.f32 %v249, %v264
    %v266 = vsub.f32 %v240, %v265
    %v267 = vlaneseq
    %v268 = vshrl.u32 %v267, 7
    %v269 = vsub.s32 0, %v268
    %v270 = vrot.slane %v264, %v269
    %v271 = vmul.f32 %v236, %v270
    %v272 = vlaneseq
    %v273 = vshrl.u32 %v272, 7
    %v274 = vsub.s32 0, %v273
    %v275 = vrot.slane %v266, %v274
    %v276 = vadd.f32 %v271, %v275
    %vm277 = vcmp.ge.f32.partialorder %v276, 0.0
    %v278 = vmul.f32 %v276, 0.2
    %v279 = vsel %vm277, %v276, %v278
    %v280 = vld [vmem:[#allocation2] sm:$0xff]
    %v281 = vld [vmem:[#allocation2 + $0x8] sm:$0xff]
    %v282 = vld [vmem:[#allocation2 + $0x10] sm:$0xff]
    %v283 = vld [vmem:[#allocation2 + $0x18] sm:$0xff]
    %v284 = vld [vmem:[#allocation2 + $0x20] sm:$0xff]
    %v285 = vld [vmem:[#allocation2 + $0x28] sm:$0xff]
    %v286 = vld [vmem:[#allocation2 + $0x30] sm:$0xff]
    %v287 = vld [vmem:[#allocation2 + $0x38] sm:$0xff]
    %v288 = vld [vmem:[#allocation2 + $0xee] sm:$0x1]
    %v289 = vlaneseq
    %v290 = vshrl.u32 %v289, 7
    %v291 = vsub.s32 0, %v290
    %v292 = vrot.slane %v288, %v291
    %v294 = vsel %vm241, %v279, 0
    %296 = vmatprep.subr.mxu0 0.0
    %297 = vmatpush1.msra.mxu0 0.0
    %298 = vmatprep.subr.mxu0 0.0
    %299 = vmatpush1.msra.mxu0 0.0
    %300 = vmatprep.subr.mxu0 0.0
    %301 = vmatpush1.msra.mxu0 0.0
    %302 = vmatprep.subr.mxu0 0.0
    %303 = vmatpush1.msra.mxu0 0.0
    %304 = vmatprep.subr.mxu0 0.0
    %305 = vmatpush1.msra.mxu0 0.0
    %306 = vmatprep.subr.mxu0 0.0
    %307 = vmatpush1.msra.mxu0 0.0
    %308 = vmatprep.subr.mxu0 0.0
    %309 = vmatpush1.msra.mxu0 0.0
    %310 = vmatprep.subr.mxu0 0.0
    %311 = vmatpush1.msra.mxu0 0.0
    %312 = vmatprep.subr.mxu0 0.0
    %313 = vmatpush1.msra.mxu0 %v287
    %314 = vmatprep.subr.mxu0 0.0
    %315 = vmatpush1.msra.mxu0 %v286
    %316 = vmatprep.subr.mxu0 0.0
    %317 = vmatpush1.msra.mxu0 %v285
    %318 = vmatprep.subr.mxu0 0.0
    %319 = vmatpush1.msra.mxu0 %v284
    %320 = vmatprep.subr.mxu0 0.0
    %321 = vmatpush1.msra.mxu0 %v283
    %322 = vmatprep.subr.mxu0 0.0
    %323 = vmatpush1.msra.mxu0 %v282
    %324 = vmatprep.subr.mxu0 0.0
    %325 = vmatpush1.msra.mxu0 %v281
    %326 = vmatprep.subr.mxu0 0.0
    %327 = vmatpush1.msra.mxu0 %v280
    %328 = vmatprep.subr.mxu0 0.0
    %329 = vmatpush2.msra.mxu0 0.0
    %330 = vmatprep.subr.mxu0 0.0
    %331 = vmatpush2.msra.mxu0 0.0
    %332 = vmatprep.subr.mxu0 0.0
    %333 = vmatpush2.msra.mxu0 0.0
    %334 = vmatprep.subr.mxu0 0.0
    %335 = vmatpush2.msra.mxu0 0.0
    %336 = vmatprep.subr.mxu0 0.0
    %337 = vmatpush2.msra.mxu0 0.0
    %338 = vmatprep.subr.mxu0 0.0
    %339 = vmatpush2.msra.mxu0 0.0
    %340 = vmatprep.subr.mxu0 0.0
    %341 = vmatpush2.msra.mxu0 0.0
    %342 = vmatprep.subr.mxu0 0.0
    %343 = vmatpush2.msra.mxu0 0.0
    %344 = vmatprep.subr.mxu0 0.0
    %345 = vmatpush2.msra.mxu0 0.0
    %346 = vmatprep.subr.mxu0 0.0
    %347 = vmatpush2.msra.mxu0 0.0
    %348 = vmatprep.subr.mxu0 0.0
    %349 = vmatpush2.msra.mxu0 0.0
    %350 = vmatprep.subr.mxu0 0.0
    %351 = vmatpush2.msra.mxu0 0.0
    %352 = vmatprep.subr.mxu0 0.0
    %353 = vmatpush2.msra.mxu0 0.0
    %354 = vmatprep.subr.mxu0 0.0
    %355 = vmatpush2.msra.mxu0 0.0
    %356 = vmatprep.subr.mxu0 0.0
    %357 = vmatpush2.msra.mxu0 0.0
    %358 = vmatprep.subr.mxu0 0.0
    %359 = vmatpush2.msra.mxu0 0.0
    %360 = vmatprep.mubr.f32.mxu0 0.0
    %361 = vmatmul.mubr.f32.gmra.mxu0 %v294
    %v362 = vpop.f32.mrf.mxu0
    %v363 = vadd.f32 %v292, %v362
    %v364 = vpop.f32.mrf.mxu0
    %365 = vdwg.mxu0
    %v366 = vld [vmem:[#allocation2 + $0xef] sm:$0x1]
    %v367 = vld [vmem:[#allocation2 + $0xf0] sm:$0x1]
    %v368 = vrot.slane %v363, 4
    %v369 = vadd.f32 %v363, %v368
    %v370 = vrot.slane %v369, 2
    %v371 = vadd.f32 %v369, %v370
    %v372 = vrot.slane %v371, 1
    %v373 = vadd.f32 %v371, %v372
    %v374 = vmul.f32 %v373, 0.125
    %v375 = vmul.f32 %v363, %v363
    %v376 = vrot.slane %v375, 4
    %v377 = vadd.f32 %v375, %v376
    %v378 = vrot.slane %v377, 2
    %v379 = vadd.f32 %v377, %v378
    %v380 = vrot.slane %v379, 1
    %v381 = vadd.f32 %v379, %v380
    %v382 = vmul.f32 %v381, 0.125
    %v383 = vmul.f32 %v374, %v374
    %v384 = vsub.f32 %v382, %v383
    %v385 = vmax.f32 %v384, 0.0
    %v386 = vadd.f32 %v385, 1e-05
    %v387 = vrsqrt.pop %v386
    %v388 = vmul.f32 %v366, %v387
    %v389 = vmul.f32 %v374, %v388
    %v390 = vsub.f32 %v367, %v389
    %v391 = vlaneseq
    %v392 = vshrl.u32 %v391, 7
    %v393 = vsub.s32 0, %v392
    %v394 = vrot.slane %v388, %v393
    %v395 = vmul.f32 %v363, %v394
    %v396 = vlaneseq
    %v397 = vshrl.u32 %v396, 7
    %v398 = vsub.s32 0, %v397
    %v399 = vrot.slane %v390, %v398
    %v400 = vadd.f32 %v395, %v399
    %vm401 = vcmp.ge.f32.partialorder %v400, 0.0
    %v402 = vmul.f32 %v400, 0.2
    %v403 = vsel %vm401, %v400, %v402
    %v404 = vld [vmem:[#allocation2 + $0x48] sm:$0xff]
    %v405 = vld [vmem:[#allocation2 + $0x50] sm:$0xff]
    %v406 = vld [vmem:[#allocation2 + $0x58] sm:$0xff]
    %v407 = vld [vmem:[#allocation2 + $0x60] sm:$0xff]
    %v408 = vld [vmem:[#allocation2 + $0x68] sm:$0xff]
    %v409 = vld [vmem:[#allocation2 + $0x70] sm:$0xff]
    %v410 = vld [vmem:[#allocation2 + $0x78] sm:$0xff]
    %v411 = vld [vmem:[#allocation2 + $0x80] sm:$0xff]
    %v412 = vld [vmem:[#allocation2 + $0x88] sm:$0xff]
    %v413 = vld [vmem:[#allocation2 + $0x90] sm:$0xff]
    %v414 = vld [vmem:[#allocation2 + $0x98] sm:$0xff]
    %v415 = vld [vmem:[#allocation2 + $0xa0] sm:$0xff]
    %v416 = vld [vmem:[#allocation2 + $0xa8] sm:$0xff]
    %v417 = vld [vmem:[#allocation2 + $0xb0] sm:$0xff]
    %v418 = vld [vmem:[#allocation2 + $0xb8] sm:$0xff]
    %v419 = vld [vmem:[#allocation2 + $0xc0] sm:$0xff]
    %v420 = vld [vmem:[#allocation2 + $0xf1] sm:$0x1]
    %v421 = vlaneseq
    %v422 = vshrl.u32 %v421, 7
    %v423 = vsub.s32 0, %v422
    %v424 = vrot.slane %v420, %v423
    %441 = vrot.lane.b32.xlu0 %v404, 64
    %v442 = vpop.permute.xlu0 %441
    %443 = vrot.lane.b32.xlu0 %v405, 64
    %v444 = vpop.permute.xlu0 %443
    %445 = vrot.lane.b32.xlu0 %v406, 64
    %v446 = vpop.permute.xlu0 %445
    %447 = vrot.lane.b32.xlu0 %v407, 64
    %v448 = vpop.permute.xlu0 %447
    %449 = vrot.lane.b32.xlu0 %v408, 64
    %v450 = vpop.permute.xlu0 %449
    %451 = vrot.lane.b32.xlu0 %v409, 64
    %v452 = vpop.permute.xlu0 %451
    %453 = vrot.lane.b32.xlu0 %v410, 64
    %v454 = vpop.permute.xlu0 %453
    %455 = vrot.lane.b32.xlu0 %v411, 64
    %v456 = vpop.permute.xlu0 %455
    %457 = vrot.lane.b32.xlu0 %v412, 64
    %v458 = vpop.permute.xlu0 %457
    %459 = vrot.lane.b32.xlu0 %v413, 64
    %v460 = vpop.permute.xlu0 %459
    %461 = vrot.lane.b32.xlu0 %v414, 64
    %v462 = vpop.permute.xlu0 %461
    %463 = vrot.lane.b32.xlu0 %v415, 64
    %v464 = vpop.permute.xlu0 %463
    %465 = vrot.lane.b32.xlu0 %v416, 64
    %v466 = vpop.permute.xlu0 %465
    %467 = vrot.lane.b32.xlu0 %v417, 64
    %v468 = vpop.permute.xlu0 %467
    %469 = vrot.lane.b32.xlu0 %v418, 64
    %v470 = vpop.permute.xlu0 %469
    %471 = vrot.lane.b32.xlu0 %v419, 64
    %v472 = vpop.permute.xlu0 %471
    %489 = vmatprep.subr.mxu0 0.0
    %490 = vmatpush1.msra.mxu0 %v472
    %491 = vmatprep.subr.mxu0 0.0
    %492 = vmatpush1.msra.mxu0 %v470
    %493 = vmatprep.subr.mxu0 0.0
    %494 = vmatpush1.msra.mxu0 %v468
    %495 = vmatprep.subr.mxu0 0.0
    %496 = vmatpush1.msra.mxu0 %v466
    %497 = vmatprep.subr.mxu0 0.0
    %498 = vmatpush1.msra.mxu0 %v464
    %499 = vmatprep.subr.mxu0 0.0
    %500 = vmatpush1.msra.mxu0 %v462
    %501 = vmatprep.subr.mxu0 0.0
    %502 = vmatpush1.msra.mxu0 %v460
    %503 = vmatprep.subr.mxu0 0.0
    %504 = vmatpush1.msra.mxu0 %v458
    %505 = vmatprep.subr.mxu0 0.0
    %506 = vmatpush1.msra.mxu0 %v456
    %507 = vmatprep.subr.mxu0 0.0
    %508 = vmatpush1.msra.mxu0 %v454
    %509 = vmatprep.subr.mxu0 0.0
    %510 = vmatpush1.msra.mxu0 %v452
    %511 = vmatprep.subr.mxu0 0.0
    %512 = vmatpush1.msra.mxu0 %v450
    %513 = vmatprep.subr.mxu0 0.0
    %514 = vmatpush1.msra.mxu0 %v448
    %515 = vmatprep.subr.mxu0 0.0
    %516 = vmatpush1.msra.mxu0 %v446
    %517 = vmatprep.subr.mxu0 0.0
    %518 = vmatpush1.msra.mxu0 %v444
    %519 = vmatprep.subr.mxu0 0.0
    %520 = vmatpush1.msra.mxu0 %v442
    %521 = vmatprep.subr.mxu0 0.0
    %522 = vmatpush2.msra.mxu0 0.0
    %523 = vmatprep.subr.mxu0 0.0
    %524 = vmatpush2.msra.mxu0 0.0
    %525 = vmatprep.subr.mxu0 0.0
    %526 = vmatpush2.msra.mxu0 0.0
    %527 = vmatprep.subr.mxu0 0.0
    %528 = vmatpush2.msra.mxu0 0.0
    %529 = vmatprep.subr.mxu0 0.0
    %530 = vmatpush2.msra.mxu0 0.0
    %531 = vmatprep.subr.mxu0 0.0
    %532 = vmatpush2.msra.mxu0 0.0
    %533 = vmatprep.subr.mxu0 0.0
    %534 = vmatpush2.msra.mxu0 0.0
    %535 = vmatprep.subr.mxu0 0.0
    %536 = vmatpush2.msra.mxu0 0.0
    %537 = vmatprep.subr.mxu0 0.0
    %538 = vmatpush2.msra.mxu0 0.0
    %539 = vmatprep.subr.mxu0 0.0
    %540 = vmatpush2.msra.mxu0 0.0
    %541 = vmatprep.subr.mxu0 0.0
    %542 = vmatpush2.msra.mxu0 0.0
    %543 = vmatprep.subr.mxu0 0.0
    %544 = vmatpush2.msra.mxu0 0.0
    %545 = vmatprep.subr.mxu0 0.0
    %546 = vmatpush2.msra.mxu0 0.0
    %547 = vmatprep.subr.mxu0 0.0
    %548 = vmatpush2.msra.mxu0 0.0
    %549 = vmatprep.subr.mxu0 0.0
    %550 = vmatpush2.msra.mxu0 0.0
    %551 = vmatprep.subr.mxu0 0.0
    %552 = vmatpush2.msra.mxu0 0.0
    %553 = vmatprep.mubr.f32.mxu0 0.0
    %554 = vmatmul.mubr.f32.gmra.mxu0 %v403
    %v555 = vpop.f32.mrf.mxu0
    %v556 = vadd.f32 %v424, %v555
    %v557 = vpop.f32.mrf.mxu0
    %558 = vdwg.mxu0
    %v559 = vmul.f32 %v556, 0.5
    %v560 = vmul.f32 %v559, 1.442695
    %v561 = vpow.pop %v560
    %563 = vrot.lane.b32.xlu0 %v561, 120
    %v564 = vpop.permute.xlu0 %563
    %v566 = vmul.f32 %v29, %v564
    %v567 = vadd.f32 %v556, %v566
    %v568 = vld [vmem:[#allocation2 + $0x40] sm:$0x1f]
    %v569 = vld [vmem:[#allocation2 + $0xf2] sm:$0x1]
    %v570 = vlaneseq
    %v571 = vshrl.u32 %v570, 7
    %v572 = vsub.s32 0, %v571
    %v573 = vrot.slane %v569, %v572
    %vm574 = vcmask 39936
    %v576 = vsel %vm574, %v567, 0
    %vm578 = vcmask 1044480
    %v580 = vsel %vm578, %v568, 0
    %582 = vmatprep.subr.mxu0 0.0
    %583 = vmatpush1.msra.mxu0 0.0
    %584 = vmatprep.subr.mxu0 0.0
    %585 = vmatpush1.msra.mxu0 0.0
    %586 = vmatprep.subr.mxu0 0.0
    %587 = vmatpush1.msra.mxu0 0.0
    %588 = vmatprep.subr.mxu0 0.0
    %589 = vmatpush1.msra.mxu0 0.0
    %590 = vmatprep.subr.mxu0 0.0
    %591 = vmatpush1.msra.mxu0 0.0
    %592 = vmatprep.subr.mxu0 0.0
    %593 = vmatpush1.msra.mxu0 0.0
    %594 = vmatprep.subr.mxu0 0.0
    %595 = vmatpush1.msra.mxu0 0.0
    %596 = vmatprep.subr.mxu0 0.0
    %597 = vmatpush1.msra.mxu0 0.0
    %598 = vmatprep.subr.mxu0 0.0
    %599 = vmatpush1.msra.mxu0 0.0
    %600 = vmatprep.subr.mxu0 0.0
    %601 = vmatpush1.msra.mxu0 0.0
    %602 = vmatprep.subr.mxu0 0.0
    %603 = vmatpush1.msra.mxu0 0.0
    %604 = vmatprep.subr.mxu0 0.0
    %605 = vmatpush1.msra.mxu0 0.0
    %606 = vmatprep.subr.mxu0 0.0
    %607 = vmatpush1.msra.mxu0 0.0
    %608 = vmatprep.subr.mxu0 0.0
    %609 = vmatpush1.msra.mxu0 0.0
    %610 = vmatprep.subr.mxu0 0.0
    %611 = vmatpush1.msra.mxu0 0.0
    %612 = vmatprep.subr.mxu0 0.0
    %613 = vmatpush1.msra.mxu0 %v580
    %614 = vmatprep.subr.mxu0 0.0
    %615 = vmatpush2.msra.mxu0 0.0
    %616 = vmatprep.subr.mxu0 0.0
    %617 = vmatpush2.msra.mxu0 0.0
    %618 = vmatprep.subr.mxu0 0.0
    %619 = vmatpush2.msra.mxu0 0.0
    %620 = vmatprep.subr.mxu0 0.0
    %621 = vmatpush2.msra.mxu0 0.0
    %622 = vmatprep.subr.mxu0 0.0
    %623 = vmatpush2.msra.mxu0 0.0
    %624 = vmatprep.subr.mxu0 0.0
    %625 = vmatpush2.msra.mxu0 0.0
    %626 = vmatprep.subr.mxu0 0.0
    %627 = vmatpush2.msra.mxu0 0.0
    %628 = vmatprep.subr.mxu0 0.0
    %629 = vmatpush2.msra.mxu0 0.0
    %630 = vmatprep.subr.mxu0 0.0
    %631 = vmatpush2.msra.mxu0 0.0
    %632 = vmatprep.subr.mxu0 0.0
    %633 = vmatpush2.msra.mxu0 0.0
    %634 = vmatprep.subr.mxu0 0.0
    %635 = vmatpush2.msra.mxu0 0.0
    %636 = vmatprep.subr.mxu0 0.0
    %637 = vmatpush2.msra.mxu0 0.0
    %638 = vmatprep.subr.mxu0 0.0
    %639 = vmatpush2.msra.mxu0 0.0
    %640 = vmatprep.subr.mxu0 0.0
    %641 = vmatpush2.msra.mxu0 0.0
    %642 = vmatprep.subr.mxu0 0.0
    %643 = vmatpush2.msra.mxu0 0.0
    %644 = vmatprep.subr.mxu0 0.0
    %645 = vmatpush2.msra.mxu0 0.0
    %646 = vmatprep.mubr.f32.mxu0 0.0
    %647 = vmatmul.mubr.f32.gmra.mxu0 %v576
    %v648 = vpop.f32.mrf.mxu0
    %v649 = vadd.f32 %v573, %v648
    %v650 = vpop.f32.mrf.mxu0
    %651 = vdwg.mxu0
    %v652 = vld [vmem:[#allocation2 + $0xf3] sm:$0x1]
    %v653 = vld [vmem:[#allocation2 + $0xf4] sm:$0x1]
    %v654 = vrot.slane %v649, 4
    %v655 = vadd.f32 %v649, %v654
    %v656 = vrot.slane %v655, 2
    %v657 = vadd.f32 %v655, %v656
    %v658 = vrot.slane %v657, 1
    %v659 = vadd.f32 %v657, %v658
    %v660 = vmul.f32 %v659, 0.125
    %v661 = vmul.f32 %v649, %v649
    %v662 = vrot.slane %v661, 4
    %v663 = vadd.f32 %v661, %v662
    %v664 = vrot.slane %v663, 2
    %v665 = vadd.f32 %v663, %v664
    %v666 = vrot.slane %v665, 1
    %v667 = vadd.f32 %v665, %v666
    %v668 = vmul.f32 %v667, 0.125
    %v669 = vmul.f32 %v660, %v660
    %v670 = vsub.f32 %v668, %v669
    %v671 = vmax.f32 %v670, 0.0
    %v672 = vadd.f32 %v671, 1e-05
    %v673 = vrsqrt.pop %v672
    %v674 = vmul.f32 %v652, %v673
    %v675 = vmul.f32 %v660, %v674
    %v676 = vsub.f32 %v653, %v675
    %v677 = vlaneseq
    %v678 = vshrl.u32 %v677, 7
    %v679 = vsub.s32 0, %v678
    %v680 = vrot.slane %v674, %v679
    %v681 = vmul.f32 %v649, %v680
    %v682 = vlaneseq
    %v683 = vshrl.u32 %v682, 7
    %v684 = vsub.s32 0, %v683
    %v685 = vrot.slane %v676, %v684
    %v686 = vadd.f32 %v681, %v685
    %vm687 = vcmp.ge.f32.partialorder %v686, 0.0
    %v688 = vmul.f32 %v686, 0.2
    %v689 = vsel %vm687, %v686, %v688
    %v690 = vld [vmem:[#allocation2 + $0xf5] sm:$0x1]
    %v691 = vlaneseq
    %v692 = vshrl.u32 %v691, 7
    %v693 = vsub.s32 0, %v692
    %v694 = vrot.slane %v690, %v693
    %695 = vmatprep.subr.mxu0 0.0
    %696 = vmatpush1.msra.mxu0 %v419
    %697 = vmatprep.subr.mxu0 0.0
    %698 = vmatpush1.msra.mxu0 %v418
    %699 = vmatprep.subr.mxu0 0.0
    %700 = vmatpush1.msra.mxu0 %v417
    %701 = vmatprep.subr.mxu0 0.0
    %702 = vmatpush1.msra.mxu0 %v416
    %703 = vmatprep.subr.mxu0 0.0
    %704 = vmatpush1.msra.mxu0 %v415
    %705 = vmatprep.subr.mxu0 0.0
    %706 = vmatpush1.msra.mxu0 %v414
    %707 = vmatprep.subr.mxu0 0.0
    %708 = vmatpush1.msra.mxu0 %v413
    %709 = vmatprep.subr.mxu0 0.0
    %710 = vmatpush1.msra.mxu0 %v412
    %711 = vmatprep.subr.mxu0 0.0
    %712 = vmatpush1.msra.mxu0 %v411
    %713 = vmatprep.subr.mxu0 0.0
    %714 = vmatpush1.msra.mxu0 %v410
    %715 = vmatprep.subr.mxu0 0.0
    %716 = vmatpush1.msra.mxu0 %v409
    %717 = vmatprep.subr.mxu0 0.0
    %718 = vmatpush1.msra.mxu0 %v408
    %719 = vmatprep.subr.mxu0 0.0
    %720 = vmatpush1.msra.mxu0 %v407
    %721 = vmatprep.subr.mxu0 0.0
    %722 = vmatpush1.msra.mxu0 %v406
    %723 = vmatprep.subr.mxu0 0.0
    %724 = vmatpush1.msra.mxu0 %v405
    %725 = vmatprep.subr.mxu0 0.0
    %726 = vmatpush1.msra.mxu0 %v404
    %727 = vmatprep.subr.mxu0 0.0
    %728 = vmatpush2.msra.mxu0 0.0
    %729 = vmatprep.subr.mxu0 0.0
    %730 = vmatpush2.msra.mxu0 0.0
    %731 = vmatprep.subr.mxu0 0.0
    %732 = vmatpush2.msra.mxu0 0.0
    %733 = vmatprep.subr.mxu0 0.0
    %734 = vmatpush2.msra.mxu0 0.0
    %735 = vmatprep.subr.mxu0 0.0
    %736 = vmatpush2.msra.mxu0 0.0
    %737 = vmatprep.subr.mxu0 0.0
    %738 = vmatpush2.msra.mxu0 0.0
    %739 = vmatprep.subr.mxu0 0.0
    %740 = vmatpush2.msra.mxu0 0.0
    %741 = vmatprep.subr.mxu0 0.0
    %742 = vmatpush2.msra.mxu0 0.0
    %743 = vmatprep.subr.mxu0 0.0
    %744 = vmatpush2.msra.mxu0 0.0
    %745 = vmatprep.subr.mxu0 0.0
    %746 = vmatpush2.msra.mxu0 0.0
    %747 = vmatprep.subr.mxu0 0.0
    %748 = vmatpush2.msra.mxu0 0.0
    %749 = vmatprep.subr.mxu0 0.0
    %750 = vmatpush2.msra.mxu0 0.0
    %751 = vmatprep.subr.mxu0 0.0
    %752 = vmatpush2.msra.mxu0 0.0
    %753 = vmatprep.subr.mxu0 0.0
    %754 = vmatpush2.msra.mxu0 0.0
    %755 = vmatprep.subr.mxu0 0.0
    %756 = vmatpush2.msra.mxu0 0.0
    %757 = vmatprep.subr.mxu0 0.0
    %758 = vmatpush2.msra.mxu0 0.0
    %759 = vmatprep.mubr.f32.mxu0 0.0
    %760 = vmatmul.mubr.f32.gmra.mxu0 %v689
    %v761 = vpop.f32.mrf.mxu0
    %v762 = vadd.f32 %v694, %v761
    %v763 = vpop.f32.mrf.mxu0
    %764 = vdwg.mxu0
    %v765 = vld [vmem:[#allocation2 + $0xf6] sm:$0x1]
    %v766 = vld [vmem:[#allocation2 + $0xf7] sm:$0x1]
    %v767 = vsel %vm241, %v762, 0.0
    %v768 = vrot.slane %v767, 4
    %v769 = vadd.f32 %v767, %v768
    %v770 = vrot.slane %v769, 2
    %v771 = vadd.f32 %v769, %v770
    %v772 = vrot.slane %v771, 1
    %v773 = vadd.f32 %v771, %v772
    %v774 = vmul.f32 %v773, 0.125
    %v775 = vmul.f32 %v762, %v762
    %v776 = vsel %vm241, %v775, 0.0
    %v777 = vrot.slane %v776, 4
    %v778 = vadd.f32 %v776, %v777
    %v779 = vrot.slane %v778, 2
    %v780 = vadd.f32 %v778, %v779
    %v781 = vrot.slane %v780, 1
    %v782 = vadd.f32 %v780, %v781
    %v783 = vmul.f32 %v782, 0.125
    %v784 = vmul.f32 %v774, %v774
    %v785 = vsub.f32 %v783, %v784
    %v786 = vmax.f32 %v785, 0.0
    %v787 = vadd.f32 %v786, 1e-05
    %v788 = vrsqrt.pop %v787
    %v789 = vmul.f32 %v765, %v788
    %v790 = vmul.f32 %v774, %v789
    %v791 = vsub.f32 %v766, %v790
    %v792 = vlaneseq
    %v793 = vshrl.u32 %v792, 7
    %v794 = vsub.s32 0, %v793
    %v795 = vrot.slane %v789, %v794
    %v796 = vmul.f32 %v762, %v795
    %v797 = vlaneseq
    %v798 = vshrl.u32 %v797, 7
    %v799 = vsub.s32 0, %v798
    %v800 = vrot.slane %v791, %v799
    %v801 = vadd.f32 %v796, %v800
    %vm802 = vcmp.ge.f32.partialorder %v801, 0.0
    %v803 = vmul.f32 %v801, 0.2
    %v804 = vsel %vm802, %v801, %v803
    %v805 = vld [vmem:[#allocation2 + $0x48] sm:$0xff]
    %v806 = vld [vmem:[#allocation2 + $0x50] sm:$0xff]
    %v807 = vld [vmem:[#allocation2 + $0x58] sm:$0xff]
    %v808 = vld [vmem:[#allocation2 + $0x60] sm:$0xff]
    %v809 = vld [vmem:[#allocation2 + $0x68] sm:$0xff]
    %v810 = vld [vmem:[#allocation2 + $0x70] sm:$0xff]
    %v811 = vld [vmem:[#allocation2 + $0x78] sm:$0xff]
    %v812 = vld [vmem:[#allocation2 + $0x80] sm:$0xff]
    %v813 = vld [vmem:[#allocation2 + $0xf8] sm:$0x1]
    %v814 = vlaneseq
    %v815 = vshrl.u32 %v814, 7
    %v816 = vsub.s32 0, %v815
    %v817 = vrot.slane %v813, %v816
    %826 = vrot.lane.b32.xlu0 %v805, 48
    %v827 = vpop.permute.xlu0 %826
    %828 = vrot.lane.b32.xlu0 %v806, 48
    %v829 = vpop.permute.xlu0 %828
    %830 = vrot.lane.b32.xlu0 %v807, 48
    %v831 = vpop.permute.xlu0 %830
    %832 = vrot.lane.b32.xlu0 %v808, 48
    %v833 = vpop.permute.xlu0 %832
    %834 = vrot.lane.b32.xlu0 %v809, 48
    %v835 = vpop.permute.xlu0 %834
    %836 = vrot.lane.b32.xlu0 %v810, 48
    %v837 = vpop.permute.xlu0 %836
    %838 = vrot.lane.b32.xlu0 %v811, 48
    %v839 = vpop.permute.xlu0 %838
    %840 = vrot.lane.b32.xlu0 %v812, 48
    %v841 = vpop.permute.xlu0 %840
    %v851 = vsel %vm241, %v804, 0
    %853 = vmatprep.subr.mxu0 0.0
    %854 = vmatpush1.msra.mxu0 0.0
    %855 = vmatprep.subr.mxu0 0.0
    %856 = vmatpush1.msra.mxu0 0.0
    %857 = vmatprep.subr.mxu0 0.0
    %858 = vmatpush1.msra.mxu0 0.0
    %859 = vmatprep.subr.mxu0 0.0
    %860 = vmatpush1.msra.mxu0 0.0
    %861 = vmatprep.subr.mxu0 0.0
    %862 = vmatpush1.msra.mxu0 0.0
    %863 = vmatprep.subr.mxu0 0.0
    %864 = vmatpush1.msra.mxu0 0.0
    %865 = vmatprep.subr.mxu0 0.0
    %866 = vmatpush1.msra.mxu0 0.0
    %867 = vmatprep.subr.mxu0 0.0
    %868 = vmatpush1.msra.mxu0 0.0
    %869 = vmatprep.subr.mxu0 0.0
    %870 = vmatpush1.msra.mxu0 %v841
    %871 = vmatprep.subr.mxu0 0.0
    %872 = vmatpush1.msra.mxu0 %v839
    %873 = vmatprep.subr.mxu0 0.0
    %874 = vmatpush1.msra.mxu0 %v837
    %875 = vmatprep.subr.mxu0 0.0
    %876 = vmatpush1.msra.mxu0 %v835
    %877 = vmatprep.subr.mxu0 0.0
    %878 = vmatpush1.msra.mxu0 %v833
    %879 = vmatprep.subr.mxu0 0.0
    %880 = vmatpush1.msra.mxu0 %v831
    %881 = vmatprep.subr.mxu0 0.0
    %882 = vmatpush1.msra.mxu0 %v829
    %883 = vmatprep.subr.mxu0 0.0
    %884 = vmatpush1.msra.mxu0 %v827
    %885 = vmatprep.subr.mxu0 0.0
    %886 = vmatpush2.msra.mxu0 0.0
    %887 = vmatprep.subr.mxu0 0.0
    %888 = vmatpush2.msra.mxu0 0.0
    %889 = vmatprep.subr.mxu0 0.0
    %890 = vmatpush2.msra.mxu0 0.0
    %891 = vmatprep.subr.mxu0 0.0
    %892 = vmatpush2.msra.mxu0 0.0
    %893 = vmatprep.subr.mxu0 0.0
    %894 = vmatpush2.msra.mxu0 0.0
    %895 = vmatprep.subr.mxu0 0.0
    %896 = vmatpush2.msra.mxu0 0.0
    %897 = vmatprep.subr.mxu0 0.0
    %898 = vmatpush2.msra.mxu0 0.0
    %899 = vmatprep.subr.mxu0 0.0
    %900 = vmatpush2.msra.mxu0 0.0
    %901 = vmatprep.subr.mxu0 0.0
    %902 = vmatpush2.msra.mxu0 0.0
    %903 = vmatprep.subr.mxu0 0.0
    %904 = vmatpush2.msra.mxu0 0.0
    %905 = vmatprep.subr.mxu0 0.0
    %906 = vmatpush2.msra.mxu0 0.0
    %907 = vmatprep.subr.mxu0 0.0
    %908 = vmatpush2.msra.mxu0 0.0
    %909 = vmatprep.subr.mxu0 0.0
    %910 = vmatpush2.msra.mxu0 0.0
    %911 = vmatprep.subr.mxu0 0.0
    %912 = vmatpush2.msra.mxu0 0.0
    %913 = vmatprep.subr.mxu0 0.0
    %914 = vmatpush2.msra.mxu0 0.0
    %915 = vmatprep.subr.mxu0 0.0
    %916 = vmatpush2.msra.mxu0 0.0
    %917 = vmatprep.mubr.f32.mxu0 0.0
    %918 = vmatmul.mubr.f32.gmra.mxu0 %v851
    %v919 = vpop.f32.mrf.mxu0
    %v920 = vadd.f32 %v817, %v919
    %v921 = vpop.f32.mrf.mxu0
    %922 = vdwg.mxu0
    %v923 = vld [vmem:[#allocation2 + $0xf9] sm:$0x1]
    %v924 = vld [vmem:[#allocation2 + $0xfa] sm:$0x1]
    %v925 = vsel %vm118, %v920, 0.0
    %v926 = vrot.slane %v925, 4
    %v927 = vadd.f32 %v925, %v926
    %v928 = vrot.slane %v927, 2
    %v929 = vadd.f32 %v927, %v928
    %v930 = vrot.slane %v929, 1
    %v931 = vadd.f32 %v929, %v930
    %v932 = vmul.f32 %v931, 0.125
    %v933 = vmul.f32 %v920, %v920
    %v934 = vsel %vm118, %v933, 0.0
    %v935 = vrot.slane %v934, 4
    %v936 = vadd.f32 %v934, %v935
    %v937 = vrot.slane %v936, 2
    %v938 = vadd.f32 %v936, %v937
    %v939 = vrot.slane %v938, 1
    %v940 = vadd.f32 %v938, %v939
    %v941 = vmul.f32 %v940, 0.125
    %v942 = vmul.f32 %v932, %v932
    %v943 = vsub.f32 %v941, %v942
    %v944 = vmax.f32 %v943, 0.0
    %v945 = vadd.f32 %v944, 1e-05
    %v946 = vrsqrt.pop %v945
    %v947 = vmul.f32 %v923, %v946
    %v948 = vmul.f32 %v932, %v947
    %v949 = vsub.f32 %v924, %v948
    %v950 = vlaneseq
    %v951 = vshrl.u32 %v950, 7
    %v952 = vsub.s32 0, %v951
    %v953 = vrot.slane %v947, %v952
    %v954 = vmul.f32 %v920, %v953
    %v955 = vlaneseq
    %v956 = vshrl.u32 %v955, 7
    %v957 = vsub.s32 0, %v956
    %v958 = vrot.slane %v949, %v957
    %v959 = vadd.f32 %v954, %v958
    %vm960 = vcmp.ge.f32.partialorder %v959, 0.0
    %v961 = vmul.f32 %v959, 0.2
    %v962 = vsel %vm960, %v959, %v961
    %v963 = vld [vmem:[#allocation2 + $0x48] sm:$0xff]
    %v964 = vld [vmem:[#allocation2 + $0x50] sm:$0xff]
    %v965 = vld [vmem:[#allocation2 + $0x58] sm:$0xff]
    %v966 = vld [vmem:[#allocation2 + $0x60] sm:$0xff]
    %v967 = vld [vmem:[#allocation2 + $0xfb] sm:$0x1]
    %v968 = vlaneseq
    %v969 = vshrl.u32 %v968, 7
    %v970 = vsub.s32 0, %v969
    %v971 = vrot.slane %v967, %v970
    %976 = vrot.lane.b32.xlu0 %v963, 16
    %v977 = vpop.permute.xlu0 %976
    %978 = vrot.lane.b32.xlu0 %v964, 16
    %v979 = vpop.permute.xlu0 %978
    %980 = vrot.lane.b32.xlu0 %v965, 16
    %v981 = vpop.permute.xlu0 %980
    %982 = vrot.lane.b32.xlu0 %v966, 16
    %v983 = vpop.permute.xlu0 %982
    %v989 = vsel %vm118, %v962, 0
    %991 = vmatprep.subr.mxu0 0.0
    %992 = vmatpush1.msra.mxu0 0.0
    %993 = vmatprep.subr.mxu0 0.0
    %994 = vmatpush1.msra.mxu0 0.0
    %995 = vmatprep.subr.mxu0 0.0
    %996 = vmatpush1.msra.mxu0 0.0
    %997 = vmatprep.subr.mxu0 0.0
    %998 = vmatpush1.msra.mxu0 0.0
    %999 = vmatprep.subr.mxu0 0.0
    %1000 = vmatpush1.msra.mxu0 0.0
    %1001 = vmatprep.subr.mxu0 0.0
    %1002 = vmatpush1.msra.mxu0 0.0
    %1003 = vmatprep.subr.mxu0 0.0
    %1004 = vmatpush1.msra.mxu0 0.0
    %1005 = vmatprep.subr.mxu0 0.0
    %1006 = vmatpush1.msra.mxu0 0.0
    %1007 = vmatprep.subr.mxu0 0.0
    %1008 = vmatpush1.msra.mxu0 0.0
    %1009 = vmatprep.subr.mxu0 0.0
    %1010 = vmatpush1.msra.mxu0 0.0
    %1011 = vmatprep.subr.mxu0 0.0
    %1012 = vmatpush1.msra.mxu0 0.0
    %1013 = vmatprep.subr.mxu0 0.0
    %1014 = vmatpush1.msra.mxu0 0.0
    %1015 = vmatprep.subr.mxu0 0.0
    %1016 = vmatpush1.msra.mxu0 %v983
    %1017 = vmatprep.subr.mxu0 0.0
    %1018 = vmatpush1.msra.mxu0 %v981
    %1019 = vmatprep.subr.mxu0 0.0
    %1020 = vmatpush1.msra.mxu0 %v979
    %1021 = vmatprep.subr.mxu0 0.0
    %1022 = vmatpush1.msra.mxu0 %v977
    %1023 = vmatprep.subr.mxu0 0.0
    %1024 = vmatpush2.msra.mxu0 0.0
    %1025 = vmatprep.subr.mxu0 0.0
    %1026 = vmatpush2.msra.mxu0 0.0
    %1027 = vmatprep.subr.mxu0 0.0
    %1028 = vmatpush2.msra.mxu0 0.0
    %1029 = vmatprep.subr.mxu0 0.0
    %1030 = vmatpush2.msra.mxu0 0.0
    %1031 = vmatprep.subr.mxu0 0.0
    %1032 = vmatpush2.msra.mxu0 0.0
    %1033 = vmatprep.subr.mxu0 0.0
    %1034 = vmatpush2.msra.mxu0 0.0
    %1035 = vmatprep.subr.mxu0 0.0
    %1036 = vmatpush2.msra.mxu0 0.0
    %1037 = vmatprep.subr.mxu0 0.0
    %1038 = vmatpush2.msra.mxu0 0.0
    %1039 = vmatprep.subr.mxu0 0.0
    %1040 = vmatpush2.msra.mxu0 0.0
    %1041 = vmatprep.subr.mxu0 0.0
    %1042 = vmatpush2.msra.mxu0 0.0
    %1043 = vmatprep.subr.mxu0 0.0
    %1044 = vmatpush2.msra.mxu0 0.0
    %1045 = vmatprep.subr.mxu0 0.0
    %1046 = vmatpush2.msra.mxu0 0.0
    %1047 = vmatprep.subr.mxu0 0.0
    %1048 = vmatpush2.msra.mxu0 0.0
    %1049 = vmatprep.subr.mxu0 0.0
    %1050 = vmatpush2.msra.mxu0 0.0
    %1051 = vmatprep.subr.mxu0 0.0
    %1052 = vmatpush2.msra.mxu0 0.0
    %1053 = vmatprep.subr.mxu0 0.0
    %1054 = vmatpush2.msra.mxu0 0.0
    %1055 = vmatprep.mubr.f32.mxu0 0.0
    %1056 = vmatmul.mubr.f32.gmra.mxu0 %v989
    %v1057 = vpop.f32.mrf.mxu0
    %v1058 = vadd.f32 %v971, %v1057
    %v1059 = vpop.f32.mrf.mxu0
    %1060 = vdwg.mxu0
    %1062 = vrot.lane.b32.xlu0 %v556, 2
    %v1063 = vpop.permute.xlu0 %1062
    %1065 = vrot.lane.b32.xlu0 %v556, 127
    %v1066 = vpop.permute.xlu0 %1065
    %v1068 = vsel %vm39, %v1058, %v1063
    %vm1069 = vcmask 56320
    %v1070 = vsel %vm1069, %v1068, %v1066
    %vm1071 = vcmask 97280
    %v1072 = vsel %vm1071, %v1070, 0.0
    %vm1073 = vcmask 130048
    %1074 = vst.msk [vmem:[%s3] sm:$0xff] %vm1073, %v1072
    // Predicated region
    $region18: #{vae_forward.1} parent=1 // pred_check
      _
    $region19: #{vae_forward.1} parent=1 // pred_check_branch
      %1076 = sbr.rel (0) target = $region21
    $region20: #{vae_forward.1} parent=1 // pred_region
      _
    $region21: #{vae_forward.1} parent=1 // pred_fallthru
      _
    // Predicated region
    $region22: #{vae_forward.1} parent=1 // pred_check
      _
    $region23: #{vae_forward.1} parent=1 // pred_check_branch
      %1078 = sbr.rel (0) target = $region25
    $region24: #{vae_forward.1} parent=1 // pred_region
      _
    $region25: #{vae_forward.1} parent=1 // pred_fallthru
      _
    %1079 = vsyncpa [#allocation3], 1

</llo_original>
